<compile_context>
chip_gen: v7x
topology: tpu7x:2x2x1
jax: 0.10.0
libtpu: 0.0.40
codegen_flags: <defaults>
</compile_context>

<pallas_src>
import functools
import math

import jax
import jax.numpy as jnp
from jax.experimental import pallas as pl
from jax.experimental.pallas import tpu as pltpu


NEG_SLOPE = 0.01   # F.leaky_relu default
_LANE = 128
_SUBLANE = 8


def _round_up(n, m):
    return ((n + m - 1) // m) * m


# ----------------------------------------------------------------------------
# Hardware introspection (with safe fallbacks)
# ----------------------------------------------------------------------------
def _device_kind():
    try:
        return jax.devices()[0].device_kind.lower()
    except Exception:
        return ""


def _is_v5(kind=None):
    kind = _device_kind() if kind is None else kind
    return "v5" in kind


def _feature_align():
    # v6e/v7x MXUs are 256x256 -> 256-aligned feature dims fill the array;
    # v5e's 128x128 MXU gains nothing from the extra padding.
    kind = _device_kind()
    if ("v6" in kind) or ("v7" in kind):
        return 256
    return _LANE


def _vmem_capacity_bytes():
    kind = _device_kind()
    fallback = (64 << 20) if "v7" in kind else (128 << 20)
    try:
        info = pltpu.get_tpu_info()
        cap = int(getattr(info, "vmem_capacity_bytes", 0))
        return cap if cap > 0 else fallback
    except Exception:
        return fallback


# ----------------------------------------------------------------------------
# Kernel
# ----------------------------------------------------------------------------
def _ffn_kernel(x_ref,
                w1_ref, b1_ref,
                w2_ref, b2_ref,
                w3_ref, b3_ref,
                w5_ref, b5_ref,
                out_ref,
                *, compute_dtype, epilogue_dtype):
    """One (TB, F) batch tile through the fused 4-layer MLP.

    Weights are (Fin, Fout) in `compute_dtype` (BN already folded in); biases
    are (1, Fout) f32.  Matmuls run on the MXU with f32 accumulation; the
    bias + LeakyReLU epilogue runs in `epilogue_dtype` on the VPU.
    """

    def block(h, w_ref, b_ref):
        y = jnp.dot(h, w_ref[...], preferred_element_type=jnp.float32)      # MXU
        y = y.astype(epilogue_dtype) + b_ref[...].astype(epilogue_dtype)    # VPU
        y = jnp.maximum(y, NEG_SLOPE * y)                                   # LeakyReLU
        # Dropout (eval) = identity.
        return y.astype(compute_dtype)

    h = x_ref[...].astype(compute_dtype)
    h = block(h, w1_ref, b1_ref)
    h = block(h, w2_ref, b2_ref)
    h = block(h, w3_ref, b3_ref)
    out = jnp.dot(h, w5_ref[...], preferred_element_type=jnp.float32) + b5_ref[...]
    out_ref[...] = out.astype(out_ref.dtype)


# ----------------------------------------------------------------------------
# Parameter construction / preparation
# ----------------------------------------------------------------------------
def make_raw_params(key, input_size, hidden_size, output_size, eps=1e-5):
    """PyTorch-layout parameters (weights (Fout, Fin), biases (Fout,)) plus
    fresh BatchNorm1d state, mirroring the module's init scheme."""
    keys = jax.random.split(key, 8)

    def xavier(k, fan_out, fan_in):
        a = math.sqrt(6.0 / (fan_in + fan_out))
        return jax.random.uniform(k, (fan_out, fan_in), jnp.float32, -a, a)

    def bias(k, fan_in, fan_out):
        bound = 1.0 / math.sqrt(fan_in)
        return jax.random.uniform(k, (fan_out,), jnp.float32, -bound, bound)

    def bn(num_features):
        return dict(gamma=jnp.ones((num_features,), jnp.float32),
                    beta=jnp.zeros((num_features,), jnp.float32),
                    mean=jnp.zeros((num_features,), jnp.float32),
                    var=jnp.ones((num_features,), jnp.float32),
                    eps=eps)

    return dict(
        fc1=dict(w=xavier(keys[0], hidden_size, input_size),
                 b=bias(keys[1], input_size, hidden_size)),
        fc2=dict(w=xavier(keys[2], hidden_size, hidden_size),
                 b=bias(keys[3], hidden_size, hidden_size)),
        fc3=dict(w=xavier(keys[4], hidden_size, hidden_size),
                 b=bias(keys[5], hidden_size, hidden_size)),
        fc5=dict(w=xavier(keys[6], output_size, hidden_size),
                 b=bias(keys[7], hidden_size, output_size)),
        bn1=bn(hidden_size), bn2=bn(hidden_size), bn3=bn(hidden_size),
    )


def _fold_bn_into_linear(w, b, bn):
    """eval-mode BN(x @ W^T + b) == x @ (scale*W)^T + ((b - mean)*scale + beta)."""
    scale = bn["gamma"] / jnp.sqrt(bn["var"] + bn["eps"])      # (Fout,)
    w_f = w * scale[:, None]                                   # scale output rows
    b_f = (b - bn["mean"]) * scale + bn["beta"]
    return w_f, b_f


def prepare_params(raw, *, compute_dtype=jnp.bfloat16, feature_align=None):
    """Fold BN into Linear, transpose to (Fin, Fout), zero-pad feature dims to
    multiples of the MXU width (256 on v6e/v7x, 128 on v5e), and cast weights
    to `compute_dtype` (biases stay f32)."""
    if feature_align is None:
        feature_align = _feature_align()

    w1, b1 = _fold_bn_into_linear(raw["fc1"]["w"], raw["fc1"]["b"], raw["bn1"])
    w2, b2 = _fold_bn_into_linear(raw["fc2"]["w"], raw["fc2"]["b"], raw["bn2"])
    w3, b3 = _fold_bn_into_linear(raw["fc3"]["w"], raw["fc3"]["b"], raw["bn3"])
    w5, b5 = raw["fc5"]["w"], raw["fc5"]["b"]

    in_f, hid, out_f = w1.shape[1], w1.shape[0], w5.shape[0]
    in_p = _round_up(in_f, feature_align)
    hid_p = _round_up(hid, feature_align)
    out_p = _round_up(out_f, feature_align)

    def prep(w, b, rows_p, cols_p):
        wt = w.T                                               # (Fin, Fout)
        wt = jnp.pad(wt, ((0, rows_p - wt.shape[0]), (0, cols_p - wt.shape[1])))
        bp = jnp.pad(b, (0, cols_p - b.shape[0])).reshape(1, cols_p)
        return wt.astype(compute_dtype), bp.astype(jnp.float32)

    w1p, b1p = prep(w1, b1, in_p, hid_p)
    w2p, b2p = prep(w2, b2, hid_p, hid_p)
    w3p, b3p = prep(w3, b3, hid_p, hid_p)
    w5p, b5p = prep(w5, b5, hid_p, out_p)

    return dict(w1=w1p, b1=b1p, w2=w2p, b2=b2p, w3=w3p, b3=b3p,
                w5=w5p, b5=b5p,
                in_features=in_f, out_features=out_f,
                compute_dtype=compute_dtype)


# ----------------------------------------------------------------------------
# Wrapper
# ----------------------------------------------------------------------------
def _choose_batch_tile(B, batch_tile, min_tiles):
    """Batch tile: multiple of 8 sublanes, capped so the grid has at least
    `min_tiles` steps when the batch allows (feeds both v7x TensorCores)."""
    tb = min(batch_tile, _round_up(pl.cdiv(B, min_tiles), _SUBLANE))
    return max(tb, _SUBLANE)


def fcffn_forward(x, params, *, batch_tile=None, out_dtype=None):
    kind = _device_kind()
    compute_dtype = params["compute_dtype"]
    out_dtype = compute_dtype if out_dtype is None else out_dtype
    # bf16 epilogue on bf16-VALU generations (v6e/v7x); f32 on v5e / f32 path.
    epilogue_dtype = (jnp.float32
                      if (compute_dtype == jnp.float32 or _is_v5(kind))
                      else compute_dtype)

    in_f = params["in_features"]
    out_f = params["out_features"]
    assert x.shape[1] == in_f

    in_p, hid_p = params["w1"].shape
    out_p = params["w5"].shape[1]

    B = x.shape[0]
    if batch_tile is None:
        # v7x: keep tiles smaller so both TCs get work; v5e/v6e: bigger tiles
        # amortize per-step pipeline overhead (128 MiB VMEM has room).
        batch_tile = 256 if "v7" in kind else 512
    min_tiles = 2 if "v7" in kind else 1
    TB = _choose_batch_tile(B, batch_tile, min_tiles)
    n_tiles = pl.cdiv(B, TB)
    B_p = n_tiles * TB

    # Skip the wrapper-side pad/cast HBM round-trip when nothing is needed.
    x_p = x
    if (B_p != B) or (in_p != in_f):
        x_p = jnp.pad(x_p, ((0, B_p - B), (0, in_p - in_f)))
    if x_p.dtype != compute_dtype:
        x_p = x_p.astype(compute_dtype)

    weight_operands = (params["w1"], params["b1"],
                       params["w2"], params["b2"],
                       params["w3"], params["b3"],
                       params["w5"], params["b5"])
    operands = (x_p,) + weight_operands

    def weight_specs(single_buffer):
        if single_buffer:
            # Constant index map => block never changes; single-buffer it.
            return [pl.BlockSpec(a.shape, lambda i: (0, 0),
                                 pipeline_mode=pl.Buffered(1))
                    for a in weight_operands]
        return [pl.BlockSpec(a.shape, lambda i: (0, 0)) for a in weight_operands]

    out_specs = pl.BlockSpec((TB, out_p), lambda i: (i, 0))

    # Generation-aware VMEM limit: ~87.5% of physical capacity
    # (~56 MiB on v7x, ~112 MiB on v5e/v6e) -- headroom for compiler scratch.
    vmem_limit = int(_vmem_capacity_bytes() * 0.875)

    itemsize = jnp.dtype(compute_dtype).itemsize
    resident_bytes = sum(int(a.size) * a.dtype.itemsize for a in weight_operands)
    flops = 2 * B_p * (in_p * hid_p + 2 * hid_p * hid_p + hid_p * out_p)
    bytes_accessed = int(x_p.size * x_p.dtype.itemsize + resident_bytes
                         + B_p * out_p * jnp.dtype(out_dtype).itemsize)
    cost = pl.CostEstimate(flops=flops, transcendentals=0,
                           bytes_accessed=bytes_accessed)

    kernel = functools.partial(_ffn_kernel,
                               compute_dtype=compute_dtype,
                               epilogue_dtype=epilogue_dtype)

    def call(single_buffer_weights):
        in_specs = ([pl.BlockSpec((TB, in_p), lambda i: (i, 0))]
                    + weight_specs(single_buffer_weights))
        return pl.pallas_call(
            kernel,
            out_shape=jax.ShapeDtypeStruct((B_p, out_p), out_dtype),
            grid=(n_tiles,),
            in_specs=in_specs,
            out_specs=out_specs,
            compiler_params=pltpu.CompilerParams(
                dimension_semantics=("parallel",),
                vmem_limit_bytes=vmem_limit),
            cost_estimate=cost,
        )(*operands)

    try:
        out_padded = call(True)
    except Exception:
        # Fallback if single-buffered (Buffered(1)) resident specs are rejected
        # by this backend/version; correctness identical, just more VMEM.
        out_padded = call(False)

    return out_padded[:B, :out_f]


# ----------------------------------------------------------------------------
# Pure-JAX reference (eval-mode PyTorch semantics, unpadded)
# ----------------------------------------------------------------------------
def fcffn_reference(x, raw):
    def bn(y, p):
        return (y - p["mean"]) / jnp.sqrt(p["var"] + p["eps"]) * p["gamma"] + p["beta"]

    def layer(h, fc, bnp):
        y = h @ fc["w"].T + fc["b"]
        y = bn(y, bnp)
        return jnp.where(y > 0, y, NEG_SLOPE * y)

    h = layer(x, raw["fc1"], raw["bn1"])
    h = layer(h, raw["fc2"], raw["bn2"])
    h = layer(h, raw["fc3"], raw["bn3"])
    return h @ raw["fc5"]["w"].T + raw["fc5"]["b"]


if __name__ == "__main__":
    input_size, hidden_size, output_size = 16, 32, 8
    batch = 8

    key = jax.random.PRNGKey(0)
    k_x, k_p = jax.random.split(key)
    x = jax.random.normal(k_x, (batch, input_size), jnp.float32)
    raw = make_raw_params(k_p, input_size, hidden_size, output_size)
    ref = fcffn_reference(x, raw)

    # f32 path (tight tolerance).
    p_f32 = prepare_params(raw, compute_dtype=jnp.float32)
    out_f32 = jax.block_until_ready(fcffn_forward(x, p_f32))
    assert out_f32.shape == (batch, output_size)
    assert jnp.allclose(out_f32, ref, atol=1e-5, rtol=1e-5), \
        "Pallas f32 output mismatch vs reference"

    # Default bf16 path: bf16 weights/activations/output, f32 MXU accumulation.
    p_bf16 = prepare_params(raw)     # compute_dtype defaults to bfloat16
    out_bf16 = jax.block_until_ready(fcffn_forward(x, p_bf16))
    assert out_bf16.shape == (batch, output_size)
    assert jnp.allclose(out_bf16.astype(jnp.float32), ref, atol=5e-2, rtol=5e-2), \
        "Pallas bf16 output mismatch vs reference"

    print("KERNEL_OK")
</pallas_src>

<mosaic_0001>
module attributes {stable_mosaic.version = 11 : i64} {
  func.func @_ffn_kernel(%arg0: i32, %arg1: memref<8x128xf32, #tpu.memory_space<vmem>>, %arg2: memref<128x128xf32, #tpu.memory_space<vmem>>, %arg3: memref<1x128xf32, #tpu.memory_space<vmem>>, %arg4: memref<128x128xf32, #tpu.memory_space<vmem>>, %arg5: memref<1x128xf32, #tpu.memory_space<vmem>>, %arg6: memref<128x128xf32, #tpu.memory_space<vmem>>, %arg7: memref<1x128xf32, #tpu.memory_space<vmem>>, %arg8: memref<128x128xf32, #tpu.memory_space<vmem>>, %arg9: memref<1x128xf32, #tpu.memory_space<vmem>>, %arg10: memref<8x128xf32, #tpu.memory_space<vmem>>) attributes {dimension_semantics = [#tpu.dimension_semantics<parallel>], iteration_bounds = array<i64: 1>, scalar_prefetch = 0 : i64, scratch_operands = 0 : i64, tpu.core_type = #tpu.core_type<tc>, window_params = [{transform_indices = @transform_0, window_bounds = array<i64: 8, 128>}, {pipeline_mode = #tpu.pipeline_mode<synchronous>, transform_indices = @transform_1, window_bounds = array<i64: 128, 128>}, {pipeline_mode = #tpu.pipeline_mode<synchronous>, transform_indices = @transform_2, window_bounds = array<i64: 1, 128>}, {pipeline_mode = #tpu.pipeline_mode<synchronous>, transform_indices = @transform_3, window_bounds = array<i64: 128, 128>}, {pipeline_mode = #tpu.pipeline_mode<synchronous>, transform_indices = @transform_4, window_bounds = array<i64: 1, 128>}, {pipeline_mode = #tpu.pipeline_mode<synchronous>, transform_indices = @transform_5, window_bounds = array<i64: 128, 128>}, {pipeline_mode = #tpu.pipeline_mode<synchronous>, transform_indices = @transform_6, window_bounds = array<i64: 1, 128>}, {pipeline_mode = #tpu.pipeline_mode<synchronous>, transform_indices = @transform_7, window_bounds = array<i64: 128, 128>}, {pipeline_mode = #tpu.pipeline_mode<synchronous>, transform_indices = @transform_8, window_bounds = array<i64: 1, 128>}, {transform_indices = @transform_9, window_bounds = array<i64: 8, 128>}]} {
    %c0 = arith.constant 0 : index
    %c0_0 = arith.constant 0 : index
    %0 = vector.load %arg1[%c0, %c0_0] : memref<8x128xf32, #tpu.memory_space<vmem>>, vector<8x128xf32>
    %c0_1 = arith.constant 0 : index
    %c0_2 = arith.constant 0 : index
    %1 = vector.load %arg2[%c0_1, %c0_2] : memref<128x128xf32, #tpu.memory_space<vmem>>, vector<128x128xf32>
    %cst = arith.constant dense<0.000000e+00> : vector<8x128xf32>
    %2 = tpu.matmul %0, %1, %cst {dimension_numbers = #tpu.dot_dimension_numbers<[1], [0], [0], [1], [0, 0, 1, 1], [], []>} : vector<8x128xf32>, vector<128x128xf32>, vector<8x128xf32> -> vector<8x128xf32>
    %c0_3 = arith.constant 0 : index
    %c0_4 = arith.constant 0 : index
    %3 = vector.load %arg3[%c0_3, %c0_4] : memref<1x128xf32, #tpu.memory_space<vmem>>, vector<1x128xf32>
    %4 = vector.broadcast %3 : vector<1x128xf32> to vector<8x128xf32>
    %5 = arith.addf %2, %4 : vector<8x128xf32>
    %cst_5 = arith.constant 0.00999999977 : f32
    %6 = vector.broadcast %cst_5 : f32 to vector<8x128xf32>
    %7 = arith.mulf %6, %5 : vector<8x128xf32>
    %8 = arith.maximumf %5, %7 : vector<8x128xf32>
    %c0_6 = arith.constant 0 : index
    %c0_7 = arith.constant 0 : index
    %9 = vector.load %arg4[%c0_6, %c0_7] : memref<128x128xf32, #tpu.memory_space<vmem>>, vector<128x128xf32>
    %cst_8 = arith.constant dense<0.000000e+00> : vector<8x128xf32>
    %10 = tpu.matmul %8, %9, %cst_8 {dimension_numbers = #tpu.dot_dimension_numbers<[1], [0], [0], [1], [0, 0, 1, 1], [], []>} : vector<8x128xf32>, vector<128x128xf32>, vector<8x128xf32> -> vector<8x128xf32>
    %c0_9 = arith.constant 0 : index
    %c0_10 = arith.constant 0 : index
    %11 = vector.load %arg5[%c0_9, %c0_10] : memref<1x128xf32, #tpu.memory_space<vmem>>, vector<1x128xf32>
    %12 = vector.broadcast %11 : vector<1x128xf32> to vector<8x128xf32>
    %13 = arith.addf %10, %12 : vector<8x128xf32>
    %cst_11 = arith.constant 0.00999999977 : f32
    %14 = vector.broadcast %cst_11 : f32 to vector<8x128xf32>
    %15 = arith.mulf %14, %13 : vector<8x128xf32>
    %16 = arith.maximumf %13, %15 : vector<8x128xf32>
    %c0_12 = arith.constant 0 : index
    %c0_13 = arith.constant 0 : index
    %17 = vector.load %arg6[%c0_12, %c0_13] : memref<128x128xf32, #tpu.memory_space<vmem>>, vector<128x128xf32>
    %cst_14 = arith.constant dense<0.000000e+00> : vector<8x128xf32>
    %18 = tpu.matmul %16, %17, %cst_14 {dimension_numbers = #tpu.dot_dimension_numbers<[1], [0], [0], [1], [0, 0, 1, 1], [], []>} : vector<8x128xf32>, vector<128x128xf32>, vector<8x128xf32> -> vector<8x128xf32>
    %c0_15 = arith.constant 0 : index
    %c0_16 = arith.constant 0 : index
    %19 = vector.load %arg7[%c0_15, %c0_16] : memref<1x128xf32, #tpu.memory_space<vmem>>, vector<1x128xf32>
    %20 = vector.broadcast %19 : vector<1x128xf32> to vector<8x128xf32>
    %21 = arith.addf %18, %20 : vector<8x128xf32>
    %cst_17 = arith.constant 0.00999999977 : f32
    %22 = vector.broadcast %cst_17 : f32 to vector<8x128xf32>
    %23 = arith.mulf %22, %21 : vector<8x128xf32>
    %24 = arith.maximumf %21, %23 : vector<8x128xf32>
    %c0_18 = arith.constant 0 : index
    %c0_19 = arith.constant 0 : index
    %25 = vector.load %arg8[%c0_18, %c0_19] : memref<128x128xf32, #tpu.memory_space<vmem>>, vector<128x128xf32>
    %cst_20 = arith.constant dense<0.000000e+00> : vector<8x128xf32>
    %26 = tpu.matmul %24, %25, %cst_20 {dimension_numbers = #tpu.dot_dimension_numbers<[1], [0], [0], [1], [0, 0, 1, 1], [], []>} : vector<8x128xf32>, vector<128x128xf32>, vector<8x128xf32> -> vector<8x128xf32>
    %c0_21 = arith.constant 0 : index
    %c0_22 = arith.constant 0 : index
    %27 = vector.load %arg9[%c0_21, %c0_22] : memref<1x128xf32, #tpu.memory_space<vmem>>, vector<1x128xf32>
    %28 = vector.broadcast %27 : vector<1x128xf32> to vector<8x128xf32>
    %29 = arith.addf %26, %28 : vector<8x128xf32>
    %c0_23 = arith.constant 0 : index
    %c0_24 = arith.constant 0 : index
    %30 = vector.load %arg10[%c0_23, %c0_24] : memref<8x128xf32, #tpu.memory_space<vmem>>, vector<8x128xf32>
    tpu.vector_store %arg10[%c0_23, %c0_24], %29 {strides = array<i32>} : memref<8x128xf32, #tpu.memory_space<vmem>>, vector<8x128xf32>,
    return
  }
  func.func @transform_0(%arg0: i32) -> (i32, i32) {
    %c0_i32 = arith.constant 0 : i32
    %c0_i32_0 = arith.constant 0 : i32
    return %arg0, %c0_i32 : i32, i32
  }
  func.func @transform_1(%arg0: i32) -> (i32, i32) {
    %c0_i32 = arith.constant 0 : i32
    %c0_i32_0 = arith.constant 0 : i32
    %c0_i32_1 = arith.constant 0 : i32
    return %c0_i32, %c0_i32_0 : i32, i32
  }
  func.func @transform_2(%arg0: i32) -> (i32, i32) {
    %c0_i32 = arith.constant 0 : i32
    %c0_i32_0 = arith.constant 0 : i32
    %c0_i32_1 = arith.constant 0 : i32
    return %c0_i32, %c0_i32_0 : i32, i32
  }
  func.func @transform_3(%arg0: i32) -> (i32, i32) {
    %c0_i32 = arith.constant 0 : i32
    %c0_i32_0 = arith.constant 0 : i32
    %c0_i32_1 = arith.constant 0 : i32
    return %c0_i32, %c0_i32_0 : i32, i32
  }
  func.func @transform_4(%arg0: i32) -> (i32, i32) {
    %c0_i32 = arith.constant 0 : i32
    %c0_i32_0 = arith.constant 0 : i32
    %c0_i32_1 = arith.constant 0 : i32
    return %c0_i32, %c0_i32_0 : i32, i32
  }
  func.func @transform_5(%arg0: i32) -> (i32, i32) {
    %c0_i32 = arith.constant 0 : i32
    %c0_i32_0 = arith.constant 0 : i32
    %c0_i32_1 = arith.constant 0 : i32
    return %c0_i32, %c0_i32_0 : i32, i32
  }
  func.func @transform_6(%arg0: i32) -> (i32, i32) {
    %c0_i32 = arith.constant 0 : i32
    %c0_i32_0 = arith.constant 0 : i32
    %c0_i32_1 = arith.constant 0 : i32
    return %c0_i32, %c0_i32_0 : i32, i32
  }
  func.func @transform_7(%arg0: i32) -> (i32, i32) {
    %c0_i32 = arith.constant 0 : i32
    %c0_i32_0 = arith.constant 0 : i32
    %c0_i32_1 = arith.constant 0 : i32
    return %c0_i32, %c0_i32_0 : i32, i32
  }
  func.func @transform_8(%arg0: i32) -> (i32, i32) {
    %c0_i32 = arith.constant 0 : i32
    %c0_i32_0 = arith.constant 0 : i32
    %c0_i32_1 = arith.constant 0 : i32
    return %c0_i32, %c0_i32_0 : i32, i32
  }
  func.func @transform_9(%arg0: i32) -> (i32, i32) {
    %c0_i32 = arith.constant 0 : i32
    %c0_i32_0 = arith.constant 0 : i32
    return %arg0, %c0_i32 : i32, i32
  }
}

module attributes {stable_mosaic.version = 11 : i64} {
  func.func @_ffn_kernel(%arg0: i32, %arg1: memref<8x128xf32, #tpu.memory_space<vmem>>, %arg2: memref<128x128xf32, #tpu.memory_space<vmem>>, %arg3: memref<1x128xf32, #tpu.memory_space<vmem>>, %arg4: memref<128x128xf32, #tpu.memory_space<vmem>>, %arg5: memref<1x128xf32, #tpu.memory_space<vmem>>, %arg6: memref<128x128xf32, #tpu.memory_space<vmem>>, %arg7: memref<1x128xf32, #tpu.memory_space<vmem>>, %arg8: memref<128x128xf32, #tpu.memory_space<vmem>>, %arg9: memref<1x128xf32, #tpu.memory_space<vmem>>, %arg10: memref<8x128xf32, #tpu.memory_space<vmem>>) attributes {dimension_semantics = [#tpu.dimension_semantics<parallel>], iteration_bounds = array<i64: 1>, scalar_prefetch = 0 : i64, scratch_operands = 0 : i64, tpu.core_type = #tpu.core_type<tc>, window_params = [{transform_indices = @transform_0, window_bounds = array<i64: 8, 128>}, {pipeline_mode = #tpu.pipeline_mode<synchronous>, transform_indices = @transform_1, window_bounds = array<i64: 128, 128>}, {pipeline_mode = #tpu.pipeline_mode<synchronous>, transform_indices = @transform_2, window_bounds = array<i64: 1, 128>}, {pipeline_mode = #tpu.pipeline_mode<synchronous>, transform_indices = @transform_3, window_bounds = array<i64: 128, 128>}, {pipeline_mode = #tpu.pipeline_mode<synchronous>, transform_indices = @transform_4, window_bounds = array<i64: 1, 128>}, {pipeline_mode = #tpu.pipeline_mode<synchronous>, transform_indices = @transform_5, window_bounds = array<i64: 128, 128>}, {pipeline_mode = #tpu.pipeline_mode<synchronous>, transform_indices = @transform_6, window_bounds = array<i64: 1, 128>}, {pipeline_mode = #tpu.pipeline_mode<synchronous>, transform_indices = @transform_7, window_bounds = array<i64: 128, 128>}, {pipeline_mode = #tpu.pipeline_mode<synchronous>, transform_indices = @transform_8, window_bounds = array<i64: 1, 128>}, {transform_indices = @transform_9, window_bounds = array<i64: 8, 128>}]} {
    %c0 = arith.constant 0 : index
    %c0_0 = arith.constant 0 : index
    %0 = vector.load %arg1[%c0, %c0_0] : memref<8x128xf32, #tpu.memory_space<vmem>>, vector<8x128xf32>
    %c0_1 = arith.constant 0 : index
    %c0_2 = arith.constant 0 : index
    %1 = vector.load %arg2[%c0_1, %c0_2] : memref<128x128xf32, #tpu.memory_space<vmem>>, vector<128x128xf32>
    %cst = arith.constant dense<0.000000e+00> : vector<8x128xf32>
    %2 = tpu.matmul %0, %1, %cst {dimension_numbers = #tpu.dot_dimension_numbers<[1], [0], [0], [1], [0, 0, 1, 1], [], []>} : vector<8x128xf32>, vector<128x128xf32>, vector<8x128xf32> -> vector<8x128xf32>
    %c0_3 = arith.constant 0 : index
    %c0_4 = arith.constant 0 : index
    %3 = vector.load %arg3[%c0_3, %c0_4] : memref<1x128xf32, #tpu.memory_space<vmem>>, vector<1x128xf32>
    %4 = vector.broadcast %3 : vector<1x128xf32> to vector<8x128xf32>
    %5 = arith.addf %2, %4 : vector<8x128xf32>
    %cst_5 = arith.constant 0.00999999977 : f32
    %6 = vector.broadcast %cst_5 : f32 to vector<8x128xf32>
    %7 = arith.mulf %6, %5 : vector<8x128xf32>
    %8 = arith.maximumf %5, %7 : vector<8x128xf32>
    %c0_6 = arith.constant 0 : index
    %c0_7 = arith.constant 0 : index
    %9 = vector.load %arg4[%c0_6, %c0_7] : memref<128x128xf32, #tpu.memory_space<vmem>>, vector<128x128xf32>
    %cst_8 = arith.constant dense<0.000000e+00> : vector<8x128xf32>
    %10 = tpu.matmul %8, %9, %cst_8 {dimension_numbers = #tpu.dot_dimension_numbers<[1], [0], [0], [1], [0, 0, 1, 1], [], []>} : vector<8x128xf32>, vector<128x128xf32>, vector<8x128xf32> -> vector<8x128xf32>
    %c0_9 = arith.constant 0 : index
    %c0_10 = arith.constant 0 : index
    %11 = vector.load %arg5[%c0_9, %c0_10] : memref<1x128xf32, #tpu.memory_space<vmem>>, vector<1x128xf32>
    %12 = vector.broadcast %11 : vector<1x128xf32> to vector<8x128xf32>
    %13 = arith.addf %10, %12 : vector<8x128xf32>
    %cst_11 = arith.constant 0.00999999977 : f32
    %14 = vector.broadcast %cst_11 : f32 to vector<8x128xf32>
    %15 = arith.mulf %14, %13 : vector<8x128xf32>
    %16 = arith.maximumf %13, %15 : vector<8x128xf32>
    %c0_12 = arith.constant 0 : index
    %c0_13 = arith.constant 0 : index
    %17 = vector.load %arg6[%c0_12, %c0_13] : memref<128x128xf32, #tpu.memory_space<vmem>>, vector<128x128xf32>
    %cst_14 = arith.constant dense<0.000000e+00> : vector<8x128xf32>
    %18 = tpu.matmul %16, %17, %cst_14 {dimension_numbers = #tpu.dot_dimension_numbers<[1], [0], [0], [1], [0, 0, 1, 1], [], []>} : vector<8x128xf32>, vector<128x128xf32>, vector<8x128xf32> -> vector<8x128xf32>
    %c0_15 = arith.constant 0 : index
    %c0_16 = arith.constant 0 : index
    %19 = vector.load %arg7[%c0_15, %c0_16] : memref<1x128xf32, #tpu.memory_space<vmem>>, vector<1x128xf32>
    %20 = vector.broadcast %19 : vector<1x128xf32> to vector<8x128xf32>
    %21 = arith.addf %18, %20 : vector<8x128xf32>
    %cst_17 = arith.constant 0.00999999977 : f32
    %22 = vector.broadcast %cst_17 : f32 to vector<8x128xf32>
    %23 = arith.mulf %22, %21 : vector<8x128xf32>
    %24 = arith.maximumf %21, %23 : vector<8x128xf32>
    %c0_18 = arith.constant 0 : index
    %c0_19 = arith.constant 0 : index
    %25 = vector.load %arg8[%c0_18, %c0_19] : memref<128x128xf32, #tpu.memory_space<vmem>>, vector<128x128xf32>
    %cst_20 = arith.constant dense<0.000000e+00> : vector<8x128xf32>
    %26 = tpu.matmul %24, %25, %cst_20 {dimension_numbers = #tpu.dot_dimension_numbers<[1], [0], [0], [1], [0, 0, 1, 1], [], []>} : vector<8x128xf32>, vector<128x128xf32>, vector<8x128xf32> -> vector<8x128xf32>
    %c0_21 = arith.constant 0 : index
    %c0_22 = arith.constant 0 : index
    %27 = vector.load %arg9[%c0_21, %c0_22] : memref<1x128xf32, #tpu.memory_space<vmem>>, vector<1x128xf32>
    %28 = vector.broadcast %27 : vector<1x128xf32> to vector<8x128xf32>
    %29 = arith.addf %26, %28 : vector<8x128xf32>
    %c0_23 = arith.constant 0 : index
    %c0_24 = arith.constant 0 : index
    %30 = vector.load %arg10[%c0_23, %c0_24] : memref<8x128xf32, #tpu.memory_space<vmem>>, vector<8x128xf32>
    tpu.vector_store %arg10[%c0_23, %c0_24], %29 {strides = array<i32>} : memref<8x128xf32, #tpu.memory_space<vmem>>, vector<8x128xf32>,
    return
  }
  func.func @transform_0(%arg0: i32) -> (i32, i32) {
    %c0_i32 = arith.constant 0 : i32
    %c0_i32_0 = arith.constant 0 : i32
    return %arg0, %c0_i32 : i32, i32
  }
  func.func @transform_1(%arg0: i32) -> (i32, i32) {
    %c0_i32 = arith.constant 0 : i32
    %c0_i32_0 = arith.constant 0 : i32
    %c0_i32_1 = arith.constant 0 : i32
    return %c0_i32, %c0_i32_0 : i32, i32
  }
  func.func @transform_2(%arg0: i32) -> (i32, i32) {
    %c0_i32 = arith.constant 0 : i32
    %c0_i32_0 = arith.constant 0 : i32
    %c0_i32_1 = arith.constant 0 : i32
    return %c0_i32, %c0_i32_0 : i32, i32
  }
  func.func @transform_3(%arg0: i32) -> (i32, i32) {
    %c0_i32 = arith.constant 0 : i32
    %c0_i32_0 = arith.constant 0 : i32
    %c0_i32_1 = arith.constant 0 : i32
    return %c0_i32, %c0_i32_0 : i32, i32
  }
  func.func @transform_4(%arg0: i32) -> (i32, i32) {
    %c0_i32 = arith.constant 0 : i32
    %c0_i32_0 = arith.constant 0 : i32
    %c0_i32_1 = arith.constant 0 : i32
    return %c0_i32, %c0_i32_0 : i32, i32
  }
  func.func @transform_5(%arg0: i32) -> (i32, i32) {
    %c0_i32 = arith.constant 0 : i32
    %c0_i32_0 = arith.constant 0 : i32
    %c0_i32_1 = arith.constant 0 : i32
    return %c0_i32, %c0_i32_0 : i32, i32
  }
  func.func @transform_6(%arg0: i32) -> (i32, i32) {
    %c0_i32 = arith.constant 0 : i32
    %c0_i32_0 = arith.constant 0 : i32
    %c0_i32_1 = arith.constant 0 : i32
    return %c0_i32, %c0_i32_0 : i32, i32
  }
  func.func @transform_7(%arg0: i32) -> (i32, i32) {
    %c0_i32 = arith.constant 0 : i32
    %c0_i32_0 = arith.constant 0 : i32
    %c0_i32_1 = arith.constant 0 : i32
    return %c0_i32, %c0_i32_0 : i32, i32
  }
  func.func @transform_8(%arg0: i32) -> (i32, i32) {
    %c0_i32 = arith.constant 0 : i32
    %c0_i32_0 = arith.constant 0 : i32
    %c0_i32_1 = arith.constant 0 : i32
    return %c0_i32, %c0_i32_0 : i32, i32
  }
  func.func @transform_9(%arg0: i32) -> (i32, i32) {
    %c0_i32 = arith.constant 0 : i32
    %c0_i32_0 = arith.constant 0 : i32
    return %arg0, %c0_i32 : i32, i32
  }
}

</mosaic_0001>

<llo_original>
// kernel: tpu_custom_call.1
$region0: #{tpu_custom_call.1}
  #allocation0 [shape = 'u32[]', space=smem, size = 0x4, offset = 0x4, fixed_abs, tag = 'smem constant byte address 0x4 - core index']
  #allocation1 [shape = 'u32[144,128]{1,0:T(1,128)}', space=vmem, size = 0x12000, scoped, tag = 'internal scratch']
  %s0 = inlined_call_operand.hbm [shape: f32[8,128], index: 0, kind: input, shape index: {}]
  %s1 = inlined_call_operand.hbm [shape: f32[128,128], index: 1, kind: input, shape index: {}]
  %s2 = inlined_call_operand.hbm [shape: f32[1,128], index: 2, kind: input, shape index: {}]
  %s3 = inlined_call_operand.hbm [shape: f32[128,128], index: 3, kind: input, shape index: {}]
  %s4 = inlined_call_operand.hbm [shape: f32[1,128], index: 4, kind: input, shape index: {}]
  %s5 = inlined_call_operand.hbm [shape: f32[128,128], index: 5, kind: input, shape index: {}]
  %s6 = inlined_call_operand.hbm [shape: f32[1,128], index: 6, kind: input, shape index: {}]
  %s7 = inlined_call_operand.hbm [shape: f32[128,128], index: 7, kind: input, shape index: {}]
  %s8 = inlined_call_operand.hbm [shape: f32[1,128], index: 8, kind: input, shape index: {}]
  %s9 = inlined_call_operand.hbm [shape: f32[8,128], index: 9, kind: output, shape index: {}]
  %s10 = sld [smem:[#allocation0]]
  $region82: #{tpu_custom_call.1} parent=0
    _
  %s12 = ssub.s32 1, %s10
  %s13 = scalar_select 0, %s12, %s10
  $region1: #{tpu_custom_call.1} parent=0
    #allocation2 [shape = 'u8[4096]{0}', space=vmem, size = 0x1000, scoped, tag = 'input window, operand 0, single buffered']
    #allocation3 [shape = 's32[1]{0}', space=sflag, size = 0x4, scoped, tag = 'scoped memory for tpu_custom_call.1']
    #allocation4 [shape = 's32[1]{0}', space=sflag, size = 0x4, scoped, tag = 'scoped memory for tpu_custom_call.1']
    #allocation5 [shape = 'u8[65536]{0}', space=vmem, size = 0x10000, scoped, tag = 'input window, operand 1, single buffered']
    #allocation6 [shape = 's32[1]{0}', space=sflag, size = 0x4, scoped, tag = 'scoped memory for tpu_custom_call.1']
    #allocation7 [shape = 'u8[512]{0}', space=vmem, size = 0x400, scoped, tag = 'input window, operand 2, single buffered']
    #allocation8 [shape = 'u8[65536]{0}', space=vmem, size = 0x10000, scoped, tag = 'input window, operand 3, single buffered']
    #allocation9 [shape = 's32[1]{0}', space=sflag, size = 0x4, scoped, tag = 'scoped memory for tpu_custom_call.1']
    #allocation10 [shape = 'u8[512]{0}', space=vmem, size = 0x400, scoped, tag = 'input window, operand 4, single buffered']
    #allocation11 [shape = 'u8[65536]{0}', space=vmem, size = 0x10000, scoped, tag = 'input window, operand 5, single buffered']
    #allocation12 [shape = 's32[1]{0}', space=sflag, size = 0x4, scoped, tag = 'scoped memory for tpu_custom_call.1']
    #allocation13 [shape = 'u8[512]{0}', space=vmem, size = 0x400, scoped, tag = 'input window, operand 6, single buffered']
    #allocation14 [shape = 'u8[65536]{0}', space=vmem, size = 0x10000, scoped, tag = 'input window, operand 7, single buffered']
    #allocation15 [shape = 's32[1]{0}', space=sflag, size = 0x4, scoped, tag = 'scoped memory for tpu_custom_call.1']
    #allocation16 [shape = 'u8[512]{0}', space=vmem, size = 0x400, scoped, tag = 'input window, operand 8, single buffered']
    #allocation17 [shape = 'u8[4096]{0}', space=vmem, size = 0x1000, scoped, tag = 'output window, operand 0, single buffered']
    %14 = vsyncpa [#allocation3], 0
    %15 = vsyncpa [#allocation6], 0
    %16 = vsyncpa [#allocation9], 0
    %17 = vsyncpa [#allocation12], 0
    %18 = vsyncpa [#allocation15], 0
    %19 = vsyncpa [#allocation4], 0
    // Predicated region
    $region2: #{tpu_custom_call.1} parent=1 // pred_check
      _
    $region3: #{tpu_custom_call.1} parent=1 // pred_check_branch
      %21 = sbr.rel (0) target = $region5
    $region4: #{tpu_custom_call.1} parent=1 // pred_region
      %s23 = ssub.s32 128, 128
      %24 = vsyncadd [#allocation3], %s23
      %s26 = sshll.u32 [#allocation2], 4
      %s27 = int_to_ptr.vmem [resolvable:$true] %s26
      %29 = dma.hbm_to_vmem [thread:$0]  %s0, 128, %s27, [#allocation3]
    $region5: #{tpu_custom_call.1} parent=1 // pred_fallthru
      _
    // Predicated region
    $region6: #{tpu_custom_call.1} parent=1 // pred_check
      _
    $region7: #{tpu_custom_call.1} parent=1 // pred_check_branch
      %31 = sbr.rel (0) target = $region9
    $region8: #{tpu_custom_call.1} parent=1 // pred_region
      %s33 = ssub.s32 2048, 2048
      %34 = vsyncadd [#allocation6], %s33
      %s35 = sshll.u32 [#allocation5], 4
      %s36 = int_to_ptr.vmem [resolvable:$true] %s35
      %41 = dma.hbm_to_vmem [thread:$0]  %s1, 2048, %s36, [#allocation6], 128, 128, 8
    $region9: #{tpu_custom_call.1} parent=1 // pred_fallthru
      _
    // Predicated region
    $region10: #{tpu_custom_call.1} parent=1 // pred_check
      _
    $region11: #{tpu_custom_call.1} parent=1 // pred_check_branch
      %43 = sbr.rel (0) target = $region13
    $region12: #{tpu_custom_call.1} parent=1 // pred_region
      %s45 = ssub.s32 16, 16
      %46 = vsyncadd [#allocation6], %s45
      %s48 = sshll.u32 [#allocation7], 4
      %s49 = int_to_ptr.vmem [resolvable:$true] %s48
      %51 = dma.hbm_to_vmem [thread:$0]  %s2, 16, %s49, [#allocation6]
    $region13: #{tpu_custom_call.1} parent=1 // pred_fallthru
      _
    // Predicated region
    $region14: #{tpu_custom_call.1} parent=1 // pred_check
      _
    $region15: #{tpu_custom_call.1} parent=1 // pred_check_branch
      %53 = sbr.rel (0) target = $region17
    $region16: #{tpu_custom_call.1} parent=1 // pred_region
      %s55 = ssub.s32 2048, 2048
      %56 = vsyncadd [#allocation9], %s55
      %s57 = sshll.u32 [#allocation8], 4
      %s58 = int_to_ptr.vmem [resolvable:$true] %s57
      %63 = dma.hbm_to_vmem [thread:$0]  %s3, 2048, %s58, [#allocation9], 128, 128, 8
    $region17: #{tpu_custom_call.1} parent=1 // pred_fallthru
      _
    // Predicated region
    $region18: #{tpu_custom_call.1} parent=1 // pred_check
      _
    $region19: #{tpu_custom_call.1} parent=1 // pred_check_branch
      %65 = sbr.rel (0) target = $region21
    $region20: #{tpu_custom_call.1} parent=1 // pred_region
      %s67 = ssub.s32 16, 16
      %68 = vsyncadd [#allocation9], %s67
      %s70 = sshll.u32 [#allocation10], 4
      %s71 = int_to_ptr.vmem [resolvable:$true] %s70
      %73 = dma.hbm_to_vmem [thread:$0]  %s4, 16, %s71, [#allocation9]
    $region21: #{tpu_custom_call.1} parent=1 // pred_fallthru
      _
    // Predicated region
    $region22: #{tpu_custom_call.1} parent=1 // pred_check
      _
    $region23: #{tpu_custom_call.1} parent=1 // pred_check_branch
      %75 = sbr.rel (0) target = $region25
    $region24: #{tpu_custom_call.1} parent=1 // pred_region
      %s77 = ssub.s32 2048, 2048
      %78 = vsyncadd [#allocation12], %s77
      %s79 = sshll.u32 [#allocation11], 4
      %s80 = int_to_ptr.vmem [resolvable:$true] %s79
      %85 = dma.hbm_to_vmem [thread:$0]  %s5, 2048, %s80, [#allocation12], 128, 128, 8
    $region25: #{tpu_custom_call.1} parent=1 // pred_fallthru
      _
    // Predicated region
    $region26: #{tpu_custom_call.1} parent=1 // pred_check
      _
    $region27: #{tpu_custom_call.1} parent=1 // pred_check_branch
      %87 = sbr.rel (0) target = $region29
    $region28: #{tpu_custom_call.1} parent=1 // pred_region
      %s89 = ssub.s32 16, 16
      %90 = vsyncadd [#allocation12], %s89
      %s92 = sshll.u32 [#allocation13], 4
      %s93 = int_to_ptr.vmem [resolvable:$true] %s92
      %95 = dma.hbm_to_vmem [thread:$0]  %s6, 16, %s93, [#allocation12]
    $region29: #{tpu_custom_call.1} parent=1 // pred_fallthru
      _
    // Predicated region
    $region30: #{tpu_custom_call.1} parent=1 // pred_check
      _
    $region31: #{tpu_custom_call.1} parent=1 // pred_check_branch
      %97 = sbr.rel (0) target = $region33
    $region32: #{tpu_custom_call.1} parent=1 // pred_region
      %s99 = ssub.s32 2048, 2048
      %100 = vsyncadd [#allocation15], %s99
      %s101 = sshll.u32 [#allocation14], 4
      %s102 = int_to_ptr.vmem [resolvable:$true] %s101
      %107 = dma.hbm_to_vmem [thread:$0]  %s7, 2048, %s102, [#allocation15], 128, 128, 8
    $region33: #{tpu_custom_call.1} parent=1 // pred_fallthru
      _
    // Predicated region
    $region34: #{tpu_custom_call.1} parent=1 // pred_check
      _
    $region35: #{tpu_custom_call.1} parent=1 // pred_check_branch
      %109 = sbr.rel (0) target = $region37
    $region36: #{tpu_custom_call.1} parent=1 // pred_region
      %s111 = ssub.s32 16, 16
      %112 = vsyncadd [#allocation15], %s111
      %s114 = sshll.u32 [#allocation16], 4
      %s115 = int_to_ptr.vmem [resolvable:$true] %s114
      %117 = dma.hbm_to_vmem [thread:$0]  %s8, 16, %s115, [#allocation15]
    $region37: #{tpu_custom_call.1} parent=1 // pred_fallthru
      _
    // Predicated region
    $region38: #{tpu_custom_call.1} parent=1 // pred_check
      _
    $region39: #{tpu_custom_call.1} parent=1 // pred_check_branch
      %119 = sbr.rel (0) target = $region41
    $region40: #{tpu_custom_call.1} parent=1 // pred_region
      %120 = dma.done [#allocation3], 128
    $region41: #{tpu_custom_call.1} parent=1 // pred_fallthru
      _
    // Predicated region
    $region42: #{tpu_custom_call.1} parent=1 // pred_check
      _
    $region43: #{tpu_custom_call.1} parent=1 // pred_check_branch
      %122 = sbr.rel (0) target = $region45
    $region44: #{tpu_custom_call.1} parent=1 // pred_region
      %123 = dma.done [#allocation6], 2048
    $region45: #{tpu_custom_call.1} parent=1 // pred_fallthru
      _
    // Predicated region
    $region46: #{tpu_custom_call.1} parent=1 // pred_check
      _
    $region47: #{tpu_custom_call.1} parent=1 // pred_check_branch
      %125 = sbr.rel (0) target = $region49
    $region48: #{tpu_custom_call.1} parent=1 // pred_region
      %126 = dma.done [#allocation6], 16
    $region49: #{tpu_custom_call.1} parent=1 // pred_fallthru
      _
    // Predicated region
    $region50: #{tpu_custom_call.1} parent=1 // pred_check
      _
    $region51: #{tpu_custom_call.1} parent=1 // pred_check_branch
      %128 = sbr.rel (0) target = $region53
    $region52: #{tpu_custom_call.1} parent=1 // pred_region
      %129 = dma.done [#allocation9], 2048
    $region53: #{tpu_custom_call.1} parent=1 // pred_fallthru
      _
    // Predicated region
    $region54: #{tpu_custom_call.1} parent=1 // pred_check
      _
    $region55: #{tpu_custom_call.1} parent=1 // pred_check_branch
      %131 = sbr.rel (0) target = $region57
    $region56: #{tpu_custom_call.1} parent=1 // pred_region
      %132 = dma.done [#allocation9], 16
    $region57: #{tpu_custom_call.1} parent=1 // pred_fallthru
      _
    // Predicated region
    $region58: #{tpu_custom_call.1} parent=1 // pred_check
      _
    $region59: #{tpu_custom_call.1} parent=1 // pred_check_branch
      %134 = sbr.rel (0) target = $region61
    $region60: #{tpu_custom_call.1} parent=1 // pred_region
      %135 = dma.done [#allocation12], 2048
    $region61: #{tpu_custom_call.1} parent=1 // pred_fallthru
      _
    // Predicated region
    $region62: #{tpu_custom_call.1} parent=1 // pred_check
      _
    $region63: #{tpu_custom_call.1} parent=1 // pred_check_branch
      %137 = sbr.rel (0) target = $region65
    $region64: #{tpu_custom_call.1} parent=1 // pred_region
      %138 = dma.done [#allocation12], 16
    $region65: #{tpu_custom_call.1} parent=1 // pred_fallthru
      _
    // Predicated region
    $region66: #{tpu_custom_call.1} parent=1 // pred_check
      _
    $region67: #{tpu_custom_call.1} parent=1 // pred_check_branch
      %140 = sbr.rel (0) target = $region69
    $region68: #{tpu_custom_call.1} parent=1 // pred_region
      %141 = dma.done [#allocation15], 2048
    $region69: #{tpu_custom_call.1} parent=1 // pred_fallthru
      _
    // Predicated region
    $region70: #{tpu_custom_call.1} parent=1 // pred_check
      _
    $region71: #{tpu_custom_call.1} parent=1 // pred_check_branch
      %143 = sbr.rel (0) target = $region73
    $region72: #{tpu_custom_call.1} parent=1 // pred_region
      %144 = dma.done [#allocation15], 16
    $region73: #{tpu_custom_call.1} parent=1 // pred_fallthru
      _
    %v145 = vld [vmem:[#allocation2] sm:$0xff]
    %v146 = vld [vmem:[#allocation5] sm:$0xff]
    %v147 = vld [vmem:[#allocation5 + $0x8] sm:$0xff]
    %v148 = vld [vmem:[#allocation5 + $0x10] sm:$0xff]
    %v149 = vld [vmem:[#allocation5 + $0x18] sm:$0xff]
    %v150 = vld [vmem:[#allocation5 + $0x20] sm:$0xff]
    %v151 = vld [vmem:[#allocation5 + $0x28] sm:$0xff]
    %v152 = vld [vmem:[#allocation5 + $0x30] sm:$0xff]
    %v153 = vld [vmem:[#allocation5 + $0x38] sm:$0xff]
    %v154 = vld [vmem:[#allocation5 + $0x40] sm:$0xff]
    %v155 = vld [vmem:[#allocation5 + $0x48] sm:$0xff]
    %v156 = vld [vmem:[#allocation5 + $0x50] sm:$0xff]
    %v157 = vld [vmem:[#allocation5 + $0x58] sm:$0xff]
    %v158 = vld [vmem:[#allocation5 + $0x60] sm:$0xff]
    %v159 = vld [vmem:[#allocation5 + $0x68] sm:$0xff]
    %v160 = vld [vmem:[#allocation5 + $0x70] sm:$0xff]
    %v161 = vld [vmem:[#allocation5 + $0x78] sm:$0xff]
    %v162 = vld [vmem:[#allocation7] sm:$0x1]
    %v164 = vlaneseq
    %v165 = vshrl.u32 %v164, 7
    %v166 = vsub.s32 0, %v165
    %v167 = vrot.slane %v162, %v166
    %169 = vmatprep.subr.mxu0 0.0
    %170 = vmatpush1.msra.mxu0 %v146
    %171 = vmatprep.subr.mxu0 0.0
    %172 = vmatpush1.msra.mxu0 %v147
    %173 = vmatprep.subr.mxu0 0.0
    %174 = vmatpush1.msra.mxu0 %v148
    %175 = vmatprep.subr.mxu0 0.0
    %176 = vmatpush1.msra.mxu0 %v149
    %177 = vmatprep.subr.mxu0 0.0
    %178 = vmatpush1.msra.mxu0 %v150
    %179 = vmatprep.subr.mxu0 0.0
    %180 = vmatpush1.msra.mxu0 %v151
    %181 = vmatprep.subr.mxu0 0.0
    %182 = vmatpush1.msra.mxu0 %v152
    %183 = vmatprep.subr.mxu0 0.0
    %184 = vmatpush1.msra.mxu0 %v153
    %185 = vmatprep.subr.mxu0 0.0
    %186 = vmatpush1.msra.mxu0 %v154
    %187 = vmatprep.subr.mxu0 0.0
    %188 = vmatpush1.msra.mxu0 %v155
    %189 = vmatprep.subr.mxu0 0.0
    %190 = vmatpush1.msra.mxu0 %v156
    %191 = vmatprep.subr.mxu0 0.0
    %192 = vmatpush1.msra.mxu0 %v157
    %193 = vmatprep.subr.mxu0 0.0
    %194 = vmatpush1.msra.mxu0 %v158
    %195 = vmatprep.subr.mxu0 0.0
    %196 = vmatpush1.msra.mxu0 %v159
    %197 = vmatprep.subr.mxu0 0.0
    %198 = vmatpush1.msra.mxu0 %v160
    %199 = vmatprep.subr.mxu0 0.0
    %200 = vmatpush1.msra.mxu0 %v161
    %201 = vmatprep.subr.mxu0 0.0
    %202 = vmatpush1.msra.mxu0 0.0
    %203 = vmatprep.subr.mxu0 0.0
    %204 = vmatpush1.msra.mxu0 0.0
    %205 = vmatprep.subr.mxu0 0.0
    %206 = vmatpush1.msra.mxu0 0.0
    %207 = vmatprep.subr.mxu0 0.0
    %208 = vmatpush1.msra.mxu0 0.0
    %209 = vmatprep.subr.mxu0 0.0
    %210 = vmatpush1.msra.mxu0 0.0
    %211 = vmatprep.subr.mxu0 0.0
    %212 = vmatpush1.msra.mxu0 0.0
    %213 = vmatprep.subr.mxu0 0.0
    %214 = vmatpush1.msra.mxu0 0.0
    %215 = vmatprep.subr.mxu0 0.0
    %216 = vmatpush1.msra.mxu0 0.0
    %217 = vmatprep.subr.mxu0 0.0
    %218 = vmatpush1.msra.mxu0 0.0
    %219 = vmatprep.subr.mxu0 0.0
    %220 = vmatpush1.msra.mxu0 0.0
    %221 = vmatprep.subr.mxu0 0.0
    %222 = vmatpush1.msra.mxu0 0.0
    %223 = vmatprep.subr.mxu0 0.0
    %224 = vmatpush1.msra.mxu0 0.0
    %225 = vmatprep.subr.mxu0 0.0
    %226 = vmatpush1.msra.mxu0 0.0
    %227 = vmatprep.subr.mxu0 0.0
    %228 = vmatpush1.msra.mxu0 0.0
    %229 = vmatprep.subr.mxu0 0.0
    %230 = vmatpush1.msra.mxu0 0.0
    %231 = vmatprep.subr.mxu0 0.0
    %232 = vmatpush1.msra.mxu0 0.0
    %233 = vmatprep.mubr.f32.mxu0 0.0
    %234 = vmatmul.mubr.f32.gmra.mrb[0].mxu0 %v145
    %v235 = vpop.f32.mrb[0].mxu0
    %v236 = vadd.f32 %v167, %v235
    %v237 = vpop.f32.mrb[0].mxu0
    %238 = vdwg.mxu0
    %v239 = vmul.f32 %v236, 0.01
    %v240 = vmax.f32 %v236, %v239
    %v241 = vld [vmem:[#allocation8] sm:$0xff]
    %v242 = vld [vmem:[#allocation8 + $0x8] sm:$0xff]
    %v243 = vld [vmem:[#allocation8 + $0x10] sm:$0xff]
    %v244 = vld [vmem:[#allocation8 + $0x18] sm:$0xff]
    %v245 = vld [vmem:[#allocation8 + $0x20] sm:$0xff]
    %v246 = vld [vmem:[#allocation8 + $0x28] sm:$0xff]
    %v247 = vld [vmem:[#allocation8 + $0x30] sm:$0xff]
    %v248 = vld [vmem:[#allocation8 + $0x38] sm:$0xff]
    %v249 = vld [vmem:[#allocation8 + $0x40] sm:$0xff]
    %v250 = vld [vmem:[#allocation8 + $0x48] sm:$0xff]
    %v251 = vld [vmem:[#allocation8 + $0x50] sm:$0xff]
    %v252 = vld [vmem:[#allocation8 + $0x58] sm:$0xff]
    %v253 = vld [vmem:[#allocation8 + $0x60] sm:$0xff]
    %v254 = vld [vmem:[#allocation8 + $0x68] sm:$0xff]
    %v255 = vld [vmem:[#allocation8 + $0x70] sm:$0xff]
    %v256 = vld [vmem:[#allocation8 + $0x78] sm:$0xff]
    %v257 = vld [vmem:[#allocation10] sm:$0x1]
    %v259 = vlaneseq
    %v260 = vshrl.u32 %v259, 7
    %v261 = vsub.s32 0, %v260
    %v262 = vrot.slane %v257, %v261
    %264 = vmatprep.subr.mxu0 0.0
    %265 = vmatpush1.msra.mxu0 %v241
    %266 = vmatprep.subr.mxu0 0.0
    %267 = vmatpush1.msra.mxu0 %v242
    %268 = vmatprep.subr.mxu0 0.0
    %269 = vmatpush1.msra.mxu0 %v243
    %270 = vmatprep.subr.mxu0 0.0
    %271 = vmatpush1.msra.mxu0 %v244
    %272 = vmatprep.subr.mxu0 0.0
    %273 = vmatpush1.msra.mxu0 %v245
    %274 = vmatprep.subr.mxu0 0.0
    %275 = vmatpush1.msra.mxu0 %v246
    %276 = vmatprep.subr.mxu0 0.0
    %277 = vmatpush1.msra.mxu0 %v247
    %278 = vmatprep.subr.mxu0 0.0
    %279 = vmatpush1.msra.mxu0 %v248
    %280 = vmatprep.subr.mxu0 0.0
    %281 = vmatpush1.msra.mxu0 %v249
    %282 = vmatprep.subr.mxu0 0.0
    %283 = vmatpush1.msra.mxu0 %v250
    %284 = vmatprep.subr.mxu0 0.0
    %285 = vmatpush1.msra.mxu0 %v251
    %286 = vmatprep.subr.mxu0 0.0
    %287 = vmatpush1.msra.mxu0 %v252
    %288 = vmatprep.subr.mxu0 0.0
    %289 = vmatpush1.msra.mxu0 %v253
    %290 = vmatprep.subr.mxu0 0.0
    %291 = vmatpush1.msra.mxu0 %v254
    %292 = vmatprep.subr.mxu0 0.0
    %293 = vmatpush1.msra.mxu0 %v255
    %294 = vmatprep.subr.mxu0 0.0
    %295 = vmatpush1.msra.mxu0 %v256
    %296 = vmatprep.subr.mxu0 0.0
    %297 = vmatpush1.msra.mxu0 0.0
    %298 = vmatprep.subr.mxu0 0.0
    %299 = vmatpush1.msra.mxu0 0.0
    %300 = vmatprep.subr.mxu0 0.0
    %301 = vmatpush1.msra.mxu0 0.0
    %302 = vmatprep.subr.mxu0 0.0
    %303 = vmatpush1.msra.mxu0 0.0
    %304 = vmatprep.subr.mxu0 0.0
    %305 = vmatpush1.msra.mxu0 0.0
    %306 = vmatprep.subr.mxu0 0.0
    %307 = vmatpush1.msra.mxu0 0.0
    %308 = vmatprep.subr.mxu0 0.0
    %309 = vmatpush1.msra.mxu0 0.0
    %310 = vmatprep.subr.mxu0 0.0
    %311 = vmatpush1.msra.mxu0 0.0
    %312 = vmatprep.subr.mxu0 0.0
    %313 = vmatpush1.msra.mxu0 0.0
    %314 = vmatprep.subr.mxu0 0.0
    %315 = vmatpush1.msra.mxu0 0.0
    %316 = vmatprep.subr.mxu0 0.0
    %317 = vmatpush1.msra.mxu0 0.0
    %318 = vmatprep.subr.mxu0 0.0
    %319 = vmatpush1.msra.mxu0 0.0
    %320 = vmatprep.subr.mxu0 0.0
    %321 = vmatpush1.msra.mxu0 0.0
    %322 = vmatprep.subr.mxu0 0.0
    %323 = vmatpush1.msra.mxu0 0.0
    %324 = vmatprep.subr.mxu0 0.0
    %325 = vmatpush1.msra.mxu0 0.0
    %326 = vmatprep.subr.mxu0 0.0
    %327 = vmatpush1.msra.mxu0 0.0
    %328 = vmatprep.mubr.f32.mxu0 0.0
    %329 = vmatmul.mubr.f32.gmra.mrb[0].mxu0 %v240
    %v330 = vpop.f32.mrb[0].mxu0
    %v331 = vadd.f32 %v262, %v330
    %v332 = vpop.f32.mrb[0].mxu0
    %333 = vdwg.mxu0
    %v334 = vmul.f32 %v331, 0.01
    %v335 = vmax.f32 %v331, %v334
    %v336 = vld [vmem:[#allocation11] sm:$0xff]
    %v337 = vld [vmem:[#allocation11 + $0x8] sm:$0xff]
    %v338 = vld [vmem:[#allocation11 + $0x10] sm:$0xff]
    %v339 = vld [vmem:[#allocation11 + $0x18] sm:$0xff]
    %v340 = vld [vmem:[#allocation11 + $0x20] sm:$0xff]
    %v341 = vld [vmem:[#allocation11 + $0x28] sm:$0xff]
    %v342 = vld [vmem:[#allocation11 + $0x30] sm:$0xff]
    %v343 = vld [vmem:[#allocation11 + $0x38] sm:$0xff]
    %v344 = vld [vmem:[#allocation11 + $0x40] sm:$0xff]
    %v345 = vld [vmem:[#allocation11 + $0x48] sm:$0xff]
    %v346 = vld [vmem:[#allocation11 + $0x50] sm:$0xff]
    %v347 = vld [vmem:[#allocation11 + $0x58] sm:$0xff]
    %v348 = vld [vmem:[#allocation11 + $0x60] sm:$0xff]
    %v349 = vld [vmem:[#allocation11 + $0x68] sm:$0xff]
    %v350 = vld [vmem:[#allocation11 + $0x70] sm:$0xff]
    %v351 = vld [vmem:[#allocation11 + $0x78] sm:$0xff]
    %v352 = vld [vmem:[#allocation13] sm:$0x1]
    %v354 = vlaneseq
    %v355 = vshrl.u32 %v354, 7
    %v356 = vsub.s32 0, %v355
    %v357 = vrot.slane %v352, %v356
    %359 = vmatprep.subr.mxu0 0.0
    %360 = vmatpush1.msra.mxu0 %v336
    %361 = vmatprep.subr.mxu0 0.0
    %362 = vmatpush1.msra.mxu0 %v337
    %363 = vmatprep.subr.mxu0 0.0
    %364 = vmatpush1.msra.mxu0 %v338
    %365 = vmatprep.subr.mxu0 0.0
    %366 = vmatpush1.msra.mxu0 %v339
    %367 = vmatprep.subr.mxu0 0.0
    %368 = vmatpush1.msra.mxu0 %v340
    %369 = vmatprep.subr.mxu0 0.0
    %370 = vmatpush1.msra.mxu0 %v341
    %371 = vmatprep.subr.mxu0 0.0
    %372 = vmatpush1.msra.mxu0 %v342
    %373 = vmatprep.subr.mxu0 0.0
    %374 = vmatpush1.msra.mxu0 %v343
    %375 = vmatprep.subr.mxu0 0.0
    %376 = vmatpush1.msra.mxu0 %v344
    %377 = vmatprep.subr.mxu0 0.0
    %378 = vmatpush1.msra.mxu0 %v345
    %379 = vmatprep.subr.mxu0 0.0
    %380 = vmatpush1.msra.mxu0 %v346
    %381 = vmatprep.subr.mxu0 0.0
    %382 = vmatpush1.msra.mxu0 %v347
    %383 = vmatprep.subr.mxu0 0.0
    %384 = vmatpush1.msra.mxu0 %v348
    %385 = vmatprep.subr.mxu0 0.0
    %386 = vmatpush1.msra.mxu0 %v349
    %387 = vmatprep.subr.mxu0 0.0
    %388 = vmatpush1.msra.mxu0 %v350
    %389 = vmatprep.subr.mxu0 0.0
    %390 = vmatpush1.msra.mxu0 %v351
    %391 = vmatprep.subr.mxu0 0.0
    %392 = vmatpush1.msra.mxu0 0.0
    %393 = vmatprep.subr.mxu0 0.0
    %394 = vmatpush1.msra.mxu0 0.0
    %395 = vmatprep.subr.mxu0 0.0
    %396 = vmatpush1.msra.mxu0 0.0
    %397 = vmatprep.subr.mxu0 0.0
    %398 = vmatpush1.msra.mxu0 0.0
    %399 = vmatprep.subr.mxu0 0.0
    %400 = vmatpush1.msra.mxu0 0.0
    %401 = vmatprep.subr.mxu0 0.0
    %402 = vmatpush1.msra.mxu0 0.0
    %403 = vmatprep.subr.mxu0 0.0
    %404 = vmatpush1.msra.mxu0 0.0
    %405 = vmatprep.subr.mxu0 0.0
    %406 = vmatpush1.msra.mxu0 0.0
    %407 = vmatprep.subr.mxu0 0.0
    %408 = vmatpush1.msra.mxu0 0.0
    %409 = vmatprep.subr.mxu0 0.0
    %410 = vmatpush1.msra.mxu0 0.0
    %411 = vmatprep.subr.mxu0 0.0
    %412 = vmatpush1.msra.mxu0 0.0
    %413 = vmatprep.subr.mxu0 0.0
    %414 = vmatpush1.msra.mxu0 0.0
    %415 = vmatprep.subr.mxu0 0.0
    %416 = vmatpush1.msra.mxu0 0.0
    %417 = vmatprep.subr.mxu0 0.0
    %418 = vmatpush1.msra.mxu0 0.0
    %419 = vmatprep.subr.mxu0 0.0
    %420 = vmatpush1.msra.mxu0 0.0
    %421 = vmatprep.subr.mxu0 0.0
    %422 = vmatpush1.msra.mxu0 0.0
    %423 = vmatprep.mubr.f32.mxu0 0.0
    %424 = vmatmul.mubr.f32.gmra.mrb[0].mxu0 %v335
    %v425 = vpop.f32.mrb[0].mxu0
    %v426 = vadd.f32 %v357, %v425
    %v427 = vpop.f32.mrb[0].mxu0
    %428 = vdwg.mxu0
    %v429 = vmul.f32 %v426, 0.01
    %v430 = vmax.f32 %v426, %v429
    %v431 = vld [vmem:[#allocation14] sm:$0xff]
    %v432 = vld [vmem:[#allocation14 + $0x8] sm:$0xff]
    %v433 = vld [vmem:[#allocation14 + $0x10] sm:$0xff]
    %v434 = vld [vmem:[#allocation14 + $0x18] sm:$0xff]
    %v435 = vld [vmem:[#allocation14 + $0x20] sm:$0xff]
    %v436 = vld [vmem:[#allocation14 + $0x28] sm:$0xff]
    %v437 = vld [vmem:[#allocation14 + $0x30] sm:$0xff]
    %v438 = vld [vmem:[#allocation14 + $0x38] sm:$0xff]
    %v439 = vld [vmem:[#allocation14 + $0x40] sm:$0xff]
    %v440 = vld [vmem:[#allocation14 + $0x48] sm:$0xff]
    %v441 = vld [vmem:[#allocation14 + $0x50] sm:$0xff]
    %v442 = vld [vmem:[#allocation14 + $0x58] sm:$0xff]
    %v443 = vld [vmem:[#allocation14 + $0x60] sm:$0xff]
    %v444 = vld [vmem:[#allocation14 + $0x68] sm:$0xff]
    %v445 = vld [vmem:[#allocation14 + $0x70] sm:$0xff]
    %v446 = vld [vmem:[#allocation14 + $0x78] sm:$0xff]
    %v447 = vld [vmem:[#allocation16] sm:$0x1]
    %v449 = vlaneseq
    %v450 = vshrl.u32 %v449, 7
    %v451 = vsub.s32 0, %v450
    %v452 = vrot.slane %v447, %v451
    %454 = vmatprep.subr.mxu0 0.0
    %455 = vmatpush1.msra.mxu0 %v431
    %456 = vmatprep.subr.mxu0 0.0
    %457 = vmatpush1.msra.mxu0 %v432
    %458 = vmatprep.subr.mxu0 0.0
    %459 = vmatpush1.msra.mxu0 %v433
    %460 = vmatprep.subr.mxu0 0.0
    %461 = vmatpush1.msra.mxu0 %v434
    %462 = vmatprep.subr.mxu0 0.0
    %463 = vmatpush1.msra.mxu0 %v435
    %464 = vmatprep.subr.mxu0 0.0
    %465 = vmatpush1.msra.mxu0 %v436
    %466 = vmatprep.subr.mxu0 0.0
    %467 = vmatpush1.msra.mxu0 %v437
    %468 = vmatprep.subr.mxu0 0.0
    %469 = vmatpush1.msra.mxu0 %v438
    %470 = vmatprep.subr.mxu0 0.0
    %471 = vmatpush1.msra.mxu0 %v439
    %472 = vmatprep.subr.mxu0 0.0
    %473 = vmatpush1.msra.mxu0 %v440
    %474 = vmatprep.subr.mxu0 0.0
    %475 = vmatpush1.msra.mxu0 %v441
    %476 = vmatprep.subr.mxu0 0.0
    %477 = vmatpush1.msra.mxu0 %v442
    %478 = vmatprep.subr.mxu0 0.0
    %479 = vmatpush1.msra.mxu0 %v443
    %480 = vmatprep.subr.mxu0 0.0
    %481 = vmatpush1.msra.mxu0 %v444
    %482 = vmatprep.subr.mxu0 0.0
    %483 = vmatpush1.msra.mxu0 %v445
    %484 = vmatprep.subr.mxu0 0.0
    %485 = vmatpush1.msra.mxu0 %v446
    %486 = vmatprep.subr.mxu0 0.0
    %487 = vmatpush1.msra.mxu0 0.0
    %488 = vmatprep.subr.mxu0 0.0
    %489 = vmatpush1.msra.mxu0 0.0
    %490 = vmatprep.subr.mxu0 0.0
    %491 = vmatpush1.msra.mxu0 0.0
    %492 = vmatprep.subr.mxu0 0.0
    %493 = vmatpush1.msra.mxu0 0.0
    %494 = vmatprep.subr.mxu0 0.0
    %495 = vmatpush1.msra.mxu0 0.0
    %496 = vmatprep.subr.mxu0 0.0
    %497 = vmatpush1.msra.mxu0 0.0
    %498 = vmatprep.subr.mxu0 0.0
    %499 = vmatpush1.msra.mxu0 0.0
    %500 = vmatprep.subr.mxu0 0.0
    %501 = vmatpush1.msra.mxu0 0.0
    %502 = vmatprep.subr.mxu0 0.0
    %503 = vmatpush1.msra.mxu0 0.0
    %504 = vmatprep.subr.mxu0 0.0
    %505 = vmatpush1.msra.mxu0 0.0
    %506 = vmatprep.subr.mxu0 0.0
    %507 = vmatpush1.msra.mxu0 0.0
    %508 = vmatprep.subr.mxu0 0.0
    %509 = vmatpush1.msra.mxu0 0.0
    %510 = vmatprep.subr.mxu0 0.0
    %511 = vmatpush1.msra.mxu0 0.0
    %512 = vmatprep.subr.mxu0 0.0
    %513 = vmatpush1.msra.mxu0 0.0
    %514 = vmatprep.subr.mxu0 0.0
    %515 = vmatpush1.msra.mxu0 0.0
    %516 = vmatprep.subr.mxu0 0.0
    %517 = vmatpush1.msra.mxu0 0.0
    %518 = vmatprep.mubr.f32.mxu0 0.0
    %519 = vmatmul.mubr.f32.gmra.mrb[0].mxu0 %v430
    %v520 = vpop.f32.mrb[0].mxu0
    %v521 = vadd.f32 %v452, %v520
    %v522 = vpop.f32.mrb[0].mxu0
    %523 = vdwg.mxu0
    %524 = vst [vmem:[#allocation17] sm:$0xff] %v521
    // Predicated region
    $region74: #{tpu_custom_call.1} parent=1 // pred_check
      _
    $region75: #{tpu_custom_call.1} parent=1 // pred_check_branch
      %526 = sbr.rel (0) target = $region77
    $region76: #{tpu_custom_call.1} parent=1 // pred_region
      %s528 = ssub.s32 128, 128
      %529 = vsyncadd [#allocation4], %s528
      %s531 = sshll.u32 [#allocation17], 4
      %s532 = int_to_ptr.vmem [resolvable:$true] %s531
      %534 = dma.vmem_to_hbm [thread:$0]  %s532, 128, %s9, [#allocation4]
    $region77: #{tpu_custom_call.1} parent=1 // pred_fallthru
      _
    // Predicated region
    $region78: #{tpu_custom_call.1} parent=1 // pred_check
      _
    $region79: #{tpu_custom_call.1} parent=1 // pred_check_branch
      %536 = sbr.rel (0) target = $region81
    $region80: #{tpu_custom_call.1} parent=1 // pred_region
      %537 = dma.done [#allocation4], 128
    $region81: #{tpu_custom_call.1} parent=1 // pred_fallthru
      _
    %538 = vsyncpa [#allocation3], 1
    %539 = vsyncpa [#allocation6], 1
    %540 = vsyncpa [#allocation9], 1
    %541 = vsyncpa [#allocation12], 1
    %542 = vsyncpa [#allocation15], 1
    %543 = vsyncpa [#allocation4], 1

// kernel: tpu_custom_call.1
$region0: #{tpu_custom_call.1}
  #allocation0 [shape = 'u32[]', space=smem, size = 0x4, offset = 0x4, fixed_abs, tag = 'smem constant byte address 0x4 - core index']
  #allocation1 [shape = 'u32[144,128]{1,0:T(1,128)}', space=vmem, size = 0x12000, scoped, tag = 'internal scratch']
  %s0 = inlined_call_operand.hbm [shape: f32[8,128], index: 0, kind: input, shape index: {}]
  %s1 = inlined_call_operand.hbm [shape: f32[128,128], index: 1, kind: input, shape index: {}]
  %s2 = inlined_call_operand.hbm [shape: f32[1,128], index: 2, kind: input, shape index: {}]
  %s3 = inlined_call_operand.hbm [shape: f32[128,128], index: 3, kind: input, shape index: {}]
  %s4 = inlined_call_operand.hbm [shape: f32[1,128], index: 4, kind: input, shape index: {}]
  %s5 = inlined_call_operand.hbm [shape: f32[128,128], index: 5, kind: input, shape index: {}]
  %s6 = inlined_call_operand.hbm [shape: f32[1,128], index: 6, kind: input, shape index: {}]
  %s7 = inlined_call_operand.hbm [shape: f32[128,128], index: 7, kind: input, shape index: {}]
  %s8 = inlined_call_operand.hbm [shape: f32[1,128], index: 8, kind: input, shape index: {}]
  %s9 = inlined_call_operand.hbm [shape: f32[8,128], index: 9, kind: output, shape index: {}]
  %s10 = sld [smem:[#allocation0]]
  $region82: #{tpu_custom_call.1} parent=0
    _
  %s12 = ssub.s32 1, %s10
  %s13 = scalar_select 0, %s12, %s10
  $region1: #{tpu_custom_call.1} parent=0
    #allocation2 [shape = 'u8[4096]{0}', space=vmem, size = 0x1000, scoped, tag = 'input window, operand 0, single buffered']
    #allocation3 [shape = 's32[1]{0}', space=sflag, size = 0x4, scoped, tag = 'scoped memory for tpu_custom_call.1']
    #allocation4 [shape = 's32[1]{0}', space=sflag, size = 0x4, scoped, tag = 'scoped memory for tpu_custom_call.1']
    #allocation5 [shape = 'u8[65536]{0}', space=vmem, size = 0x10000, scoped, tag = 'input window, operand 1, single buffered']
    #allocation6 [shape = 's32[1]{0}', space=sflag, size = 0x4, scoped, tag = 'scoped memory for tpu_custom_call.1']
    #allocation7 [shape = 'u8[512]{0}', space=vmem, size = 0x400, scoped, tag = 'input window, operand 2, single buffered']
    #allocation8 [shape = 'u8[65536]{0}', space=vmem, size = 0x10000, scoped, tag = 'input window, operand 3, single buffered']
    #allocation9 [shape = 's32[1]{0}', space=sflag, size = 0x4, scoped, tag = 'scoped memory for tpu_custom_call.1']
    #allocation10 [shape = 'u8[512]{0}', space=vmem, size = 0x400, scoped, tag = 'input window, operand 4, single buffered']
    #allocation11 [shape = 'u8[65536]{0}', space=vmem, size = 0x10000, scoped, tag = 'input window, operand 5, single buffered']
    #allocation12 [shape = 's32[1]{0}', space=sflag, size = 0x4, scoped, tag = 'scoped memory for tpu_custom_call.1']
    #allocation13 [shape = 'u8[512]{0}', space=vmem, size = 0x400, scoped, tag = 'input window, operand 6, single buffered']
    #allocation14 [shape = 'u8[65536]{0}', space=vmem, size = 0x10000, scoped, tag = 'input window, operand 7, single buffered']
    #allocation15 [shape = 's32[1]{0}', space=sflag, size = 0x4, scoped, tag = 'scoped memory for tpu_custom_call.1']
    #allocation16 [shape = 'u8[512]{0}', space=vmem, size = 0x400, scoped, tag = 'input window, operand 8, single buffered']
    #allocation17 [shape = 'u8[4096]{0}', space=vmem, size = 0x1000, scoped, tag = 'output window, operand 0, single buffered']
    %14 = vsyncpa [#allocation3], 0
    %15 = vsyncpa [#allocation6], 0
    %16 = vsyncpa [#allocation9], 0
    %17 = vsyncpa [#allocation12], 0
    %18 = vsyncpa [#allocation15], 0
    %19 = vsyncpa [#allocation4], 0
    // Predicated region
    $region2: #{tpu_custom_call.1} parent=1 // pred_check
      _
    $region3: #{tpu_custom_call.1} parent=1 // pred_check_branch
      %21 = sbr.rel (0) target = $region5
    $region4: #{tpu_custom_call.1} parent=1 // pred_region
      %s23 = ssub.s32 128, 128
      %24 = vsyncadd [#allocation3], %s23
      %s26 = sshll.u32 [#allocation2], 4
      %s27 = int_to_ptr.vmem [resolvable:$true] %s26
      %29 = dma.hbm_to_vmem [thread:$0]  %s0, 128, %s27, [#allocation3]
    $region5: #{tpu_custom_call.1} parent=1 // pred_fallthru
      _
    // Predicated region
    $region6: #{tpu_custom_call.1} parent=1 // pred_check
      _
    $region7: #{tpu_custom_call.1} parent=1 // pred_check_branch
      %31 = sbr.rel (0) target = $region9
    $region8: #{tpu_custom_call.1} parent=1 // pred_region
      %s33 = ssub.s32 2048, 2048
      %34 = vsyncadd [#allocation6], %s33
      %s35 = sshll.u32 [#allocation5], 4
      %s36 = int_to_ptr.vmem [resolvable:$true] %s35
      %41 = dma.hbm_to_vmem [thread:$0]  %s1, 2048, %s36, [#allocation6], 128, 128, 8
    $region9: #{tpu_custom_call.1} parent=1 // pred_fallthru
      _
    // Predicated region
    $region10: #{tpu_custom_call.1} parent=1 // pred_check
      _
    $region11: #{tpu_custom_call.1} parent=1 // pred_check_branch
      %43 = sbr.rel (0) target = $region13
    $region12: #{tpu_custom_call.1} parent=1 // pred_region
      %s45 = ssub.s32 16, 16
      %46 = vsyncadd [#allocation6], %s45
      %s48 = sshll.u32 [#allocation7], 4
      %s49 = int_to_ptr.vmem [resolvable:$true] %s48
      %51 = dma.hbm_to_vmem [thread:$0]  %s2, 16, %s49, [#allocation6]
    $region13: #{tpu_custom_call.1} parent=1 // pred_fallthru
      _
    // Predicated region
    $region14: #{tpu_custom_call.1} parent=1 // pred_check
      _
    $region15: #{tpu_custom_call.1} parent=1 // pred_check_branch
      %53 = sbr.rel (0) target = $region17
    $region16: #{tpu_custom_call.1} parent=1 // pred_region
      %s55 = ssub.s32 2048, 2048
      %56 = vsyncadd [#allocation9], %s55
      %s57 = sshll.u32 [#allocation8], 4
      %s58 = int_to_ptr.vmem [resolvable:$true] %s57
      %63 = dma.hbm_to_vmem [thread:$0]  %s3, 2048, %s58, [#allocation9], 128, 128, 8
    $region17: #{tpu_custom_call.1} parent=1 // pred_fallthru
      _
    // Predicated region
    $region18: #{tpu_custom_call.1} parent=1 // pred_check
      _
    $region19: #{tpu_custom_call.1} parent=1 // pred_check_branch
      %65 = sbr.rel (0) target = $region21
    $region20: #{tpu_custom_call.1} parent=1 // pred_region
      %s67 = ssub.s32 16, 16
      %68 = vsyncadd [#allocation9], %s67
      %s70 = sshll.u32 [#allocation10], 4
      %s71 = int_to_ptr.vmem [resolvable:$true] %s70
      %73 = dma.hbm_to_vmem [thread:$0]  %s4, 16, %s71, [#allocation9]
    $region21: #{tpu_custom_call.1} parent=1 // pred_fallthru
      _
    // Predicated region
    $region22: #{tpu_custom_call.1} parent=1 // pred_check
      _
    $region23: #{tpu_custom_call.1} parent=1 // pred_check_branch
      %75 = sbr.rel (0) target = $region25
    $region24: #{tpu_custom_call.1} parent=1 // pred_region
      %s77 = ssub.s32 2048, 2048
      %78 = vsyncadd [#allocation12], %s77
      %s79 = sshll.u32 [#allocation11], 4
      %s80 = int_to_ptr.vmem [resolvable:$true] %s79
      %85 = dma.hbm_to_vmem [thread:$0]  %s5, 2048, %s80, [#allocation12], 128, 128, 8
    $region25: #{tpu_custom_call.1} parent=1 // pred_fallthru
      _
    // Predicated region
    $region26: #{tpu_custom_call.1} parent=1 // pred_check
      _
    $region27: #{tpu_custom_call.1} parent=1 // pred_check_branch
      %87 = sbr.rel (0) target = $region29
    $region28: #{tpu_custom_call.1} parent=1 // pred_region
      %s89 = ssub.s32 16, 16
      %90 = vsyncadd [#allocation12], %s89
      %s92 = sshll.u32 [#allocation13], 4
      %s93 = int_to_ptr.vmem [resolvable:$true] %s92
      %95 = dma.hbm_to_vmem [thread:$0]  %s6, 16, %s93, [#allocation12]
    $region29: #{tpu_custom_call.1} parent=1 // pred_fallthru
      _
    // Predicated region
    $region30: #{tpu_custom_call.1} parent=1 // pred_check
      _
    $region31: #{tpu_custom_call.1} parent=1 // pred_check_branch
      %97 = sbr.rel (0) target = $region33
    $region32: #{tpu_custom_call.1} parent=1 // pred_region
      %s99 = ssub.s32 2048, 2048
      %100 = vsyncadd [#allocation15], %s99
      %s101 = sshll.u32 [#allocation14], 4
      %s102 = int_to_ptr.vmem [resolvable:$true] %s101
      %107 = dma.hbm_to_vmem [thread:$0]  %s7, 2048, %s102, [#allocation15], 128, 128, 8
    $region33: #{tpu_custom_call.1} parent=1 // pred_fallthru
      _
    // Predicated region
    $region34: #{tpu_custom_call.1} parent=1 // pred_check
      _
    $region35: #{tpu_custom_call.1} parent=1 // pred_check_branch
      %109 = sbr.rel (0) target = $region37
    $region36: #{tpu_custom_call.1} parent=1 // pred_region
      %s111 = ssub.s32 16, 16
      %112 = vsyncadd [#allocation15], %s111
      %s114 = sshll.u32 [#allocation16], 4
      %s115 = int_to_ptr.vmem [resolvable:$true] %s114
      %117 = dma.hbm_to_vmem [thread:$0]  %s8, 16, %s115, [#allocation15]
    $region37: #{tpu_custom_call.1} parent=1 // pred_fallthru
      _
    // Predicated region
    $region38: #{tpu_custom_call.1} parent=1 // pred_check
      _
    $region39: #{tpu_custom_call.1} parent=1 // pred_check_branch
      %119 = sbr.rel (0) target = $region41
    $region40: #{tpu_custom_call.1} parent=1 // pred_region
      %120 = dma.done [#allocation3], 128
    $region41: #{tpu_custom_call.1} parent=1 // pred_fallthru
      _
    // Predicated region
    $region42: #{tpu_custom_call.1} parent=1 // pred_check
      _
    $region43: #{tpu_custom_call.1} parent=1 // pred_check_branch
      %122 = sbr.rel (0) target = $region45
    $region44: #{tpu_custom_call.1} parent=1 // pred_region
      %123 = dma.done [#allocation6], 2048
    $region45: #{tpu_custom_call.1} parent=1 // pred_fallthru
      _
    // Predicated region
    $region46: #{tpu_custom_call.1} parent=1 // pred_check
      _
    $region47: #{tpu_custom_call.1} parent=1 // pred_check_branch
      %125 = sbr.rel (0) target = $region49
    $region48: #{tpu_custom_call.1} parent=1 // pred_region
      %126 = dma.done [#allocation6], 16
    $region49: #{tpu_custom_call.1} parent=1 // pred_fallthru
      _
    // Predicated region
    $region50: #{tpu_custom_call.1} parent=1 // pred_check
      _
    $region51: #{tpu_custom_call.1} parent=1 // pred_check_branch
      %128 = sbr.rel (0) target = $region53
    $region52: #{tpu_custom_call.1} parent=1 // pred_region
      %129 = dma.done [#allocation9], 2048
    $region53: #{tpu_custom_call.1} parent=1 // pred_fallthru
      _
    // Predicated region
    $region54: #{tpu_custom_call.1} parent=1 // pred_check
      _
    $region55: #{tpu_custom_call.1} parent=1 // pred_check_branch
      %131 = sbr.rel (0) target = $region57
    $region56: #{tpu_custom_call.1} parent=1 // pred_region
      %132 = dma.done [#allocation9], 16
    $region57: #{tpu_custom_call.1} parent=1 // pred_fallthru
      _
    // Predicated region
    $region58: #{tpu_custom_call.1} parent=1 // pred_check
      _
    $region59: #{tpu_custom_call.1} parent=1 // pred_check_branch
      %134 = sbr.rel (0) target = $region61
    $region60: #{tpu_custom_call.1} parent=1 // pred_region
      %135 = dma.done [#allocation12], 2048
    $region61: #{tpu_custom_call.1} parent=1 // pred_fallthru
      _
    // Predicated region
    $region62: #{tpu_custom_call.1} parent=1 // pred_check
      _
    $region63: #{tpu_custom_call.1} parent=1 // pred_check_branch
      %137 = sbr.rel (0) target = $region65
    $region64: #{tpu_custom_call.1} parent=1 // pred_region
      %138 = dma.done [#allocation12], 16
    $region65: #{tpu_custom_call.1} parent=1 // pred_fallthru
      _
    // Predicated region
    $region66: #{tpu_custom_call.1} parent=1 // pred_check
      _
    $region67: #{tpu_custom_call.1} parent=1 // pred_check_branch
      %140 = sbr.rel (0) target = $region69
    $region68: #{tpu_custom_call.1} parent=1 // pred_region
      %141 = dma.done [#allocation15], 2048
    $region69: #{tpu_custom_call.1} parent=1 // pred_fallthru
      _
    // Predicated region
    $region70: #{tpu_custom_call.1} parent=1 // pred_check
      _
    $region71: #{tpu_custom_call.1} parent=1 // pred_check_branch
      %143 = sbr.rel (0) target = $region73
    $region72: #{tpu_custom_call.1} parent=1 // pred_region
      %144 = dma.done [#allocation15], 16
    $region73: #{tpu_custom_call.1} parent=1 // pred_fallthru
      _
    %v145 = vld [vmem:[#allocation2] sm:$0xff]
    %v146 = vld [vmem:[#allocation5] sm:$0xff]
    %v147 = vld [vmem:[#allocation5 + $0x8] sm:$0xff]
    %v148 = vld [vmem:[#allocation5 + $0x10] sm:$0xff]
    %v149 = vld [vmem:[#allocation5 + $0x18] sm:$0xff]
    %v150 = vld [vmem:[#allocation5 + $0x20] sm:$0xff]
    %v151 = vld [vmem:[#allocation5 + $0x28] sm:$0xff]
    %v152 = vld [vmem:[#allocation5 + $0x30] sm:$0xff]
    %v153 = vld [vmem:[#allocation5 + $0x38] sm:$0xff]
    %v154 = vld [vmem:[#allocation5 + $0x40] sm:$0xff]
    %v155 = vld [vmem:[#allocation5 + $0x48] sm:$0xff]
    %v156 = vld [vmem:[#allocation5 + $0x50] sm:$0xff]
    %v157 = vld [vmem:[#allocation5 + $0x58] sm:$0xff]
    %v158 = vld [vmem:[#allocation5 + $0x60] sm:$0xff]
    %v159 = vld [vmem:[#allocation5 + $0x68] sm:$0xff]
    %v160 = vld [vmem:[#allocation5 + $0x70] sm:$0xff]
    %v161 = vld [vmem:[#allocation5 + $0x78] sm:$0xff]
    %v162 = vld [vmem:[#allocation7] sm:$0x1]
    %v164 = vlaneseq
    %v165 = vshrl.u32 %v164, 7
    %v166 = vsub.s32 0, %v165
    %v167 = vrot.slane %v162, %v166
    %169 = vmatprep.subr.mxu0 0.0
    %170 = vmatpush1.msra.mxu0 %v146
    %171 = vmatprep.subr.mxu0 0.0
    %172 = vmatpush1.msra.mxu0 %v147
    %173 = vmatprep.subr.mxu0 0.0
    %174 = vmatpush1.msra.mxu0 %v148
    %175 = vmatprep.subr.mxu0 0.0
    %176 = vmatpush1.msra.mxu0 %v149
    %177 = vmatprep.subr.mxu0 0.0
    %178 = vmatpush1.msra.mxu0 %v150
    %179 = vmatprep.subr.mxu0 0.0
    %180 = vmatpush1.msra.mxu0 %v151
    %181 = vmatprep.subr.mxu0 0.0
    %182 = vmatpush1.msra.mxu0 %v152
    %183 = vmatprep.subr.mxu0 0.0
    %184 = vmatpush1.msra.mxu0 %v153
    %185 = vmatprep.subr.mxu0 0.0
    %186 = vmatpush1.msra.mxu0 %v154
    %187 = vmatprep.subr.mxu0 0.0
    %188 = vmatpush1.msra.mxu0 %v155
    %189 = vmatprep.subr.mxu0 0.0
    %190 = vmatpush1.msra.mxu0 %v156
    %191 = vmatprep.subr.mxu0 0.0
    %192 = vmatpush1.msra.mxu0 %v157
    %193 = vmatprep.subr.mxu0 0.0
    %194 = vmatpush1.msra.mxu0 %v158
    %195 = vmatprep.subr.mxu0 0.0
    %196 = vmatpush1.msra.mxu0 %v159
    %197 = vmatprep.subr.mxu0 0.0
    %198 = vmatpush1.msra.mxu0 %v160
    %199 = vmatprep.subr.mxu0 0.0
    %200 = vmatpush1.msra.mxu0 %v161
    %201 = vmatprep.subr.mxu0 0.0
    %202 = vmatpush1.msra.mxu0 0.0
    %203 = vmatprep.subr.mxu0 0.0
    %204 = vmatpush1.msra.mxu0 0.0
    %205 = vmatprep.subr.mxu0 0.0
    %206 = vmatpush1.msra.mxu0 0.0
    %207 = vmatprep.subr.mxu0 0.0
    %208 = vmatpush1.msra.mxu0 0.0
    %209 = vmatprep.subr.mxu0 0.0
    %210 = vmatpush1.msra.mxu0 0.0
    %211 = vmatprep.subr.mxu0 0.0
    %212 = vmatpush1.msra.mxu0 0.0
    %213 = vmatprep.subr.mxu0 0.0
    %214 = vmatpush1.msra.mxu0 0.0
    %215 = vmatprep.subr.mxu0 0.0
    %216 = vmatpush1.msra.mxu0 0.0
    %217 = vmatprep.subr.mxu0 0.0
    %218 = vmatpush1.msra.mxu0 0.0
    %219 = vmatprep.subr.mxu0 0.0
    %220 = vmatpush1.msra.mxu0 0.0
    %221 = vmatprep.subr.mxu0 0.0
    %222 = vmatpush1.msra.mxu0 0.0
    %223 = vmatprep.subr.mxu0 0.0
    %224 = vmatpush1.msra.mxu0 0.0
    %225 = vmatprep.subr.mxu0 0.0
    %226 = vmatpush1.msra.mxu0 0.0
    %227 = vmatprep.subr.mxu0 0.0
    %228 = vmatpush1.msra.mxu0 0.0
    %229 = vmatprep.subr.mxu0 0.0
    %230 = vmatpush1.msra.mxu0 0.0
    %231 = vmatprep.subr.mxu0 0.0
    %232 = vmatpush1.msra.mxu0 0.0
    %233 = vmatprep.mubr.f32.mxu0 0.0
    %234 = vmatmul.mubr.f32.gmra.mrb[0].mxu0 %v145
    %v235 = vpop.f32.mrb[0].mxu0
    %v236 = vadd.f32 %v167, %v235
    %v237 = vpop.f32.mrb[0].mxu0
    %238 = vdwg.mxu0
    %v239 = vmul.f32 %v236, 0.01
    %v240 = vmax.f32 %v236, %v239
    %v241 = vld [vmem:[#allocation8] sm:$0xff]
    %v242 = vld [vmem:[#allocation8 + $0x8] sm:$0xff]
    %v243 = vld [vmem:[#allocation8 + $0x10] sm:$0xff]
    %v244 = vld [vmem:[#allocation8 + $0x18] sm:$0xff]
    %v245 = vld [vmem:[#allocation8 + $0x20] sm:$0xff]
    %v246 = vld [vmem:[#allocation8 + $0x28] sm:$0xff]
    %v247 = vld [vmem:[#allocation8 + $0x30] sm:$0xff]
    %v248 = vld [vmem:[#allocation8 + $0x38] sm:$0xff]
    %v249 = vld [vmem:[#allocation8 + $0x40] sm:$0xff]
    %v250 = vld [vmem:[#allocation8 + $0x48] sm:$0xff]
    %v251 = vld [vmem:[#allocation8 + $0x50] sm:$0xff]
    %v252 = vld [vmem:[#allocation8 + $0x58] sm:$0xff]
    %v253 = vld [vmem:[#allocation8 + $0x60] sm:$0xff]
    %v254 = vld [vmem:[#allocation8 + $0x68] sm:$0xff]
    %v255 = vld [vmem:[#allocation8 + $0x70] sm:$0xff]
    %v256 = vld [vmem:[#allocation8 + $0x78] sm:$0xff]
    %v257 = vld [vmem:[#allocation10] sm:$0x1]
    %v259 = vlaneseq
    %v260 = vshrl.u32 %v259, 7
    %v261 = vsub.s32 0, %v260
    %v262 = vrot.slane %v257, %v261
    %264 = vmatprep.subr.mxu0 0.0
    %265 = vmatpush1.msra.mxu0 %v241
    %266 = vmatprep.subr.mxu0 0.0
    %267 = vmatpush1.msra.mxu0 %v242
    %268 = vmatprep.subr.mxu0 0.0
    %269 = vmatpush1.msra.mxu0 %v243
    %270 = vmatprep.subr.mxu0 0.0
    %271 = vmatpush1.msra.mxu0 %v244
    %272 = vmatprep.subr.mxu0 0.0
    %273 = vmatpush1.msra.mxu0 %v245
    %274 = vmatprep.subr.mxu0 0.0
    %275 = vmatpush1.msra.mxu0 %v246
    %276 = vmatprep.subr.mxu0 0.0
    %277 = vmatpush1.msra.mxu0 %v247
    %278 = vmatprep.subr.mxu0 0.0
    %279 = vmatpush1.msra.mxu0 %v248
    %280 = vmatprep.subr.mxu0 0.0
    %281 = vmatpush1.msra.mxu0 %v249
    %282 = vmatprep.subr.mxu0 0.0
    %283 = vmatpush1.msra.mxu0 %v250
    %284 = vmatprep.subr.mxu0 0.0
    %285 = vmatpush1.msra.mxu0 %v251
    %286 = vmatprep.subr.mxu0 0.0
    %287 = vmatpush1.msra.mxu0 %v252
    %288 = vmatprep.subr.mxu0 0.0
    %289 = vmatpush1.msra.mxu0 %v253
    %290 = vmatprep.subr.mxu0 0.0
    %291 = vmatpush1.msra.mxu0 %v254
    %292 = vmatprep.subr.mxu0 0.0
    %293 = vmatpush1.msra.mxu0 %v255
    %294 = vmatprep.subr.mxu0 0.0
    %295 = vmatpush1.msra.mxu0 %v256
    %296 = vmatprep.subr.mxu0 0.0
    %297 = vmatpush1.msra.mxu0 0.0
    %298 = vmatprep.subr.mxu0 0.0
    %299 = vmatpush1.msra.mxu0 0.0
    %300 = vmatprep.subr.mxu0 0.0
    %301 = vmatpush1.msra.mxu0 0.0
    %302 = vmatprep.subr.mxu0 0.0
    %303 = vmatpush1.msra.mxu0 0.0
    %304 = vmatprep.subr.mxu0 0.0
    %305 = vmatpush1.msra.mxu0 0.0
    %306 = vmatprep.subr.mxu0 0.0
    %307 = vmatpush1.msra.mxu0 0.0
    %308 = vmatprep.subr.mxu0 0.0
    %309 = vmatpush1.msra.mxu0 0.0
    %310 = vmatprep.subr.mxu0 0.0
    %311 = vmatpush1.msra.mxu0 0.0
    %312 = vmatprep.subr.mxu0 0.0
    %313 = vmatpush1.msra.mxu0 0.0
    %314 = vmatprep.subr.mxu0 0.0
    %315 = vmatpush1.msra.mxu0 0.0
    %316 = vmatprep.subr.mxu0 0.0
    %317 = vmatpush1.msra.mxu0 0.0
    %318 = vmatprep.subr.mxu0 0.0
    %319 = vmatpush1.msra.mxu0 0.0
    %320 = vmatprep.subr.mxu0 0.0
    %321 = vmatpush1.msra.mxu0 0.0
    %322 = vmatprep.subr.mxu0 0.0
    %323 = vmatpush1.msra.mxu0 0.0
    %324 = vmatprep.subr.mxu0 0.0
    %325 = vmatpush1.msra.mxu0 0.0
    %326 = vmatprep.subr.mxu0 0.0
    %327 = vmatpush1.msra.mxu0 0.0
    %328 = vmatprep.mubr.f32.mxu0 0.0
    %329 = vmatmul.mubr.f32.gmra.mrb[0].mxu0 %v240
    %v330 = vpop.f32.mrb[0].mxu0
    %v331 = vadd.f32 %v262, %v330
    %v332 = vpop.f32.mrb[0].mxu0
    %333 = vdwg.mxu0
    %v334 = vmul.f32 %v331, 0.01
    %v335 = vmax.f32 %v331, %v334
    %v336 = vld [vmem:[#allocation11] sm:$0xff]
    %v337 = vld [vmem:[#allocation11 + $0x8] sm:$0xff]
    %v338 = vld [vmem:[#allocation11 + $0x10] sm:$0xff]
    %v339 = vld [vmem:[#allocation11 + $0x18] sm:$0xff]
    %v340 = vld [vmem:[#allocation11 + $0x20] sm:$0xff]
    %v341 = vld [vmem:[#allocation11 + $0x28] sm:$0xff]
    %v342 = vld [vmem:[#allocation11 + $0x30] sm:$0xff]
    %v343 = vld [vmem:[#allocation11 + $0x38] sm:$0xff]
    %v344 = vld [vmem:[#allocation11 + $0x40] sm:$0xff]
    %v345 = vld [vmem:[#allocation11 + $0x48] sm:$0xff]
    %v346 = vld [vmem:[#allocation11 + $0x50] sm:$0xff]
    %v347 = vld [vmem:[#allocation11 + $0x58] sm:$0xff]
    %v348 = vld [vmem:[#allocation11 + $0x60] sm:$0xff]
    %v349 = vld [vmem:[#allocation11 + $0x68] sm:$0xff]
    %v350 = vld [vmem:[#allocation11 + $0x70] sm:$0xff]
    %v351 = vld [vmem:[#allocation11 + $0x78] sm:$0xff]
    %v352 = vld [vmem:[#allocation13] sm:$0x1]
    %v354 = vlaneseq
    %v355 = vshrl.u32 %v354, 7
    %v356 = vsub.s32 0, %v355
    %v357 = vrot.slane %v352, %v356
    %359 = vmatprep.subr.mxu0 0.0
    %360 = vmatpush1.msra.mxu0 %v336
    %361 = vmatprep.subr.mxu0 0.0
    %362 = vmatpush1.msra.mxu0 %v337
    %363 = vmatprep.subr.mxu0 0.0
    %364 = vmatpush1.msra.mxu0 %v338
    %365 = vmatprep.subr.mxu0 0.0
    %366 = vmatpush1.msra.mxu0 %v339
    %367 = vmatprep.subr.mxu0 0.0
    %368 = vmatpush1.msra.mxu0 %v340
    %369 = vmatprep.subr.mxu0 0.0
    %370 = vmatpush1.msra.mxu0 %v341
    %371 = vmatprep.subr.mxu0 0.0
    %372 = vmatpush1.msra.mxu0 %v342
    %373 = vmatprep.subr.mxu0 0.0
    %374 = vmatpush1.msra.mxu0 %v343
    %375 = vmatprep.subr.mxu0 0.0
    %376 = vmatpush1.msra.mxu0 %v344
    %377 = vmatprep.subr.mxu0 0.0
    %378 = vmatpush1.msra.mxu0 %v345
    %379 = vmatprep.subr.mxu0 0.0
    %380 = vmatpush1.msra.mxu0 %v346
    %381 = vmatprep.subr.mxu0 0.0
    %382 = vmatpush1.msra.mxu0 %v347
    %383 = vmatprep.subr.mxu0 0.0
    %384 = vmatpush1.msra.mxu0 %v348
    %385 = vmatprep.subr.mxu0 0.0
    %386 = vmatpush1.msra.mxu0 %v349
    %387 = vmatprep.subr.mxu0 0.0
    %388 = vmatpush1.msra.mxu0 %v350
    %389 = vmatprep.subr.mxu0 0.0
    %390 = vmatpush1.msra.mxu0 %v351
    %391 = vmatprep.subr.mxu0 0.0
    %392 = vmatpush1.msra.mxu0 0.0
    %393 = vmatprep.subr.mxu0 0.0
    %394 = vmatpush1.msra.mxu0 0.0
    %395 = vmatprep.subr.mxu0 0.0
    %396 = vmatpush1.msra.mxu0 0.0
    %397 = vmatprep.subr.mxu0 0.0
    %398 = vmatpush1.msra.mxu0 0.0
    %399 = vmatprep.subr.mxu0 0.0
    %400 = vmatpush1.msra.mxu0 0.0
    %401 = vmatprep.subr.mxu0 0.0
    %402 = vmatpush1.msra.mxu0 0.0
    %403 = vmatprep.subr.mxu0 0.0
    %404 = vmatpush1.msra.mxu0 0.0
    %405 = vmatprep.subr.mxu0 0.0
    %406 = vmatpush1.msra.mxu0 0.0
    %407 = vmatprep.subr.mxu0 0.0
    %408 = vmatpush1.msra.mxu0 0.0
    %409 = vmatprep.subr.mxu0 0.0
    %410 = vmatpush1.msra.mxu0 0.0
    %411 = vmatprep.subr.mxu0 0.0
    %412 = vmatpush1.msra.mxu0 0.0
    %413 = vmatprep.subr.mxu0 0.0
    %414 = vmatpush1.msra.mxu0 0.0
    %415 = vmatprep.subr.mxu0 0.0
    %416 = vmatpush1.msra.mxu0 0.0
    %417 = vmatprep.subr.mxu0 0.0
    %418 = vmatpush1.msra.mxu0 0.0
    %419 = vmatprep.subr.mxu0 0.0
    %420 = vmatpush1.msra.mxu0 0.0
    %421 = vmatprep.subr.mxu0 0.0
    %422 = vmatpush1.msra.mxu0 0.0
    %423 = vmatprep.mubr.f32.mxu0 0.0
    %424 = vmatmul.mubr.f32.gmra.mrb[0].mxu0 %v335
    %v425 = vpop.f32.mrb[0].mxu0
    %v426 = vadd.f32 %v357, %v425
    %v427 = vpop.f32.mrb[0].mxu0
    %428 = vdwg.mxu0
    %v429 = vmul.f32 %v426, 0.01
    %v430 = vmax.f32 %v426, %v429
    %v431 = vld [vmem:[#allocation14] sm:$0xff]
    %v432 = vld [vmem:[#allocation14 + $0x8] sm:$0xff]
    %v433 = vld [vmem:[#allocation14 + $0x10] sm:$0xff]
    %v434 = vld [vmem:[#allocation14 + $0x18] sm:$0xff]
    %v435 = vld [vmem:[#allocation14 + $0x20] sm:$0xff]
    %v436 = vld [vmem:[#allocation14 + $0x28] sm:$0xff]
    %v437 = vld [vmem:[#allocation14 + $0x30] sm:$0xff]
    %v438 = vld [vmem:[#allocation14 + $0x38] sm:$0xff]
    %v439 = vld [vmem:[#allocation14 + $0x40] sm:$0xff]
    %v440 = vld [vmem:[#allocation14 + $0x48] sm:$0xff]
    %v441 = vld [vmem:[#allocation14 + $0x50] sm:$0xff]
    %v442 = vld [vmem:[#allocation14 + $0x58] sm:$0xff]
    %v443 = vld [vmem:[#allocation14 + $0x60] sm:$0xff]
    %v444 = vld [vmem:[#allocation14 + $0x68] sm:$0xff]
    %v445 = vld [vmem:[#allocation14 + $0x70] sm:$0xff]
    %v446 = vld [vmem:[#allocation14 + $0x78] sm:$0xff]
    %v447 = vld [vmem:[#allocation16] sm:$0x1]
    %v449 = vlaneseq
    %v450 = vshrl.u32 %v449, 7
    %v451 = vsub.s32 0, %v450
    %v452 = vrot.slane %v447, %v451
    %454 = vmatprep.subr.mxu0 0.0
    %455 = vmatpush1.msra.mxu0 %v431
    %456 = vmatprep.subr.mxu0 0.0
    %457 = vmatpush1.msra.mxu0 %v432
    %458 = vmatprep.subr.mxu0 0.0
    %459 = vmatpush1.msra.mxu0 %v433
    %460 = vmatprep.subr.mxu0 0.0
    %461 = vmatpush1.msra.mxu0 %v434
    %462 = vmatprep.subr.mxu0 0.0
    %463 = vmatpush1.msra.mxu0 %v435
    %464 = vmatprep.subr.mxu0 0.0
    %465 = vmatpush1.msra.mxu0 %v436
    %466 = vmatprep.subr.mxu0 0.0
    %467 = vmatpush1.msra.mxu0 %v437
    %468 = vmatprep.subr.mxu0 0.0
    %469 = vmatpush1.msra.mxu0 %v438
    %470 = vmatprep.subr.mxu0 0.0
    %471 = vmatpush1.msra.mxu0 %v439
    %472 = vmatprep.subr.mxu0 0.0
    %473 = vmatpush1.msra.mxu0 %v440
    %474 = vmatprep.subr.mxu0 0.0
    %475 = vmatpush1.msra.mxu0 %v441
    %476 = vmatprep.subr.mxu0 0.0
    %477 = vmatpush1.msra.mxu0 %v442
    %478 = vmatprep.subr.mxu0 0.0
    %479 = vmatpush1.msra.mxu0 %v443
    %480 = vmatprep.subr.mxu0 0.0
    %481 = vmatpush1.msra.mxu0 %v444
    %482 = vmatprep.subr.mxu0 0.0
    %483 = vmatpush1.msra.mxu0 %v445
    %484 = vmatprep.subr.mxu0 0.0
    %485 = vmatpush1.msra.mxu0 %v446
    %486 = vmatprep.subr.mxu0 0.0
    %487 = vmatpush1.msra.mxu0 0.0
    %488 = vmatprep.subr.mxu0 0.0
    %489 = vmatpush1.msra.mxu0 0.0
    %490 = vmatprep.subr.mxu0 0.0
    %491 = vmatpush1.msra.mxu0 0.0
    %492 = vmatprep.subr.mxu0 0.0
    %493 = vmatpush1.msra.mxu0 0.0
    %494 = vmatprep.subr.mxu0 0.0
    %495 = vmatpush1.msra.mxu0 0.0
    %496 = vmatprep.subr.mxu0 0.0
    %497 = vmatpush1.msra.mxu0 0.0
    %498 = vmatprep.subr.mxu0 0.0
    %499 = vmatpush1.msra.mxu0 0.0
    %500 = vmatprep.subr.mxu0 0.0
    %501 = vmatpush1.msra.mxu0 0.0
    %502 = vmatprep.subr.mxu0 0.0
    %503 = vmatpush1.msra.mxu0 0.0
    %504 = vmatprep.subr.mxu0 0.0
    %505 = vmatpush1.msra.mxu0 0.0
    %506 = vmatprep.subr.mxu0 0.0
    %507 = vmatpush1.msra.mxu0 0.0
    %508 = vmatprep.subr.mxu0 0.0
    %509 = vmatpush1.msra.mxu0 0.0
    %510 = vmatprep.subr.mxu0 0.0
    %511 = vmatpush1.msra.mxu0 0.0
    %512 = vmatprep.subr.mxu0 0.0
    %513 = vmatpush1.msra.mxu0 0.0
    %514 = vmatprep.subr.mxu0 0.0
    %515 = vmatpush1.msra.mxu0 0.0
    %516 = vmatprep.subr.mxu0 0.0
    %517 = vmatpush1.msra.mxu0 0.0
    %518 = vmatprep.mubr.f32.mxu0 0.0
    %519 = vmatmul.mubr.f32.gmra.mrb[0].mxu0 %v430
    %v520 = vpop.f32.mrb[0].mxu0
    %v521 = vadd.f32 %v452, %v520
    %v522 = vpop.f32.mrb[0].mxu0
    %523 = vdwg.mxu0
    %524 = vst [vmem:[#allocation17] sm:$0xff] %v521
    // Predicated region
    $region74: #{tpu_custom_call.1} parent=1 // pred_check
      _
    $region75: #{tpu_custom_call.1} parent=1 // pred_check_branch
      %526 = sbr.rel (0) target = $region77
    $region76: #{tpu_custom_call.1} parent=1 // pred_region
      %s528 = ssub.s32 128, 128
      %529 = vsyncadd [#allocation4], %s528
      %s531 = sshll.u32 [#allocation17], 4
      %s532 = int_to_ptr.vmem [resolvable:$true] %s531
      %534 = dma.vmem_to_hbm [thread:$0]  %s532, 128, %s9, [#allocation4]
    $region77: #{tpu_custom_call.1} parent=1 // pred_fallthru
      _
    // Predicated region
    $region78: #{tpu_custom_call.1} parent=1 // pred_check
      _
    $region79: #{tpu_custom_call.1} parent=1 // pred_check_branch
      %536 = sbr.rel (0) target = $region81
    $region80: #{tpu_custom_call.1} parent=1 // pred_region
      %537 = dma.done [#allocation4], 128
    $region81: #{tpu_custom_call.1} parent=1 // pred_fallthru
      _
    %538 = vsyncpa [#allocation3], 1
    %539 = vsyncpa [#allocation6], 1
    %540 = vsyncpa [#allocation9], 1
    %541 = vsyncpa [#allocation12], 1
    %542 = vsyncpa [#allocation15], 1
    %543 = vsyncpa [#allocation4], 1

</llo_original>
